<compile_context>
chip_gen: v7x
topology: tpu7x:2x2x1
jax: 0.10.0
libtpu: 0.0.40
codegen_flags: <defaults>
</compile_context>

<pallas_src>
import jax
import jax.numpy as jnp
from jax import lax
from jax.experimental import pallas as pl
from jax.experimental.pallas import tpu as pltpu


def _gru_recurrence_kernel(gi_ref, w_hh_ref, b_hh_ref, out_ref):
    """Serial GRU recurrence over T steps; input projection already precomputed.

    gi_ref  : (T, B, 3*Hp) f32   x @ W_ih + b_ih, gate g at lanes [g*Hp, (g+1)*Hp)
    w_hh_ref: (Hp, 3*Hp)   f32   zero-padded recurrent weight (gate-strided columns)
    b_hh_ref: (1, 3*Hp)    f32   zero-padded recurrent bias
    out_ref : (B, Hp)      f32   final hidden state (padded lanes are exact zeros)
    """
    T = gi_ref.shape[0]
    B = gi_ref.shape[1]
    Hp = w_hh_ref.shape[0]

    w_hh = w_hh_ref[...]                                           # (Hp, 3Hp), loaded once
    b_hh = jnp.broadcast_to(b_hh_ref[...], (B, 3 * Hp))            # hoisted broadcast

    def step(t, h):
        gi = gi_ref[t]                                             # (B, 3Hp)
        gh = jnp.dot(h, w_hh, preferred_element_type=jnp.float32) + b_hh
        # Lane-tile aligned gate slices (offsets are multiples of 128).
        r = jax.nn.sigmoid(gi[:, 0:Hp] + gh[:, 0:Hp])
        z = jax.nn.sigmoid(gi[:, Hp:2 * Hp] + gh[:, Hp:2 * Hp])
        n = jnp.tanh(gi[:, 2 * Hp:3 * Hp] + r * gh[:, 2 * Hp:3 * Hp])
        return (1.0 - z) * n + z * h

    h0 = jnp.zeros((B, Hp), jnp.float32)
    h_final = lax.fori_loop(0, T, step, h0, unroll=True)
    out_ref[...] = h_final


def _pad_gate_cols(w_t, H, Hp):
    """(rows, 3H) -> (rows, 3*Hp) with gate g placed at columns [g*Hp, g*Hp+H)."""
    rows = w_t.shape[0]
    out = jnp.zeros((rows, 3 * Hp), jnp.float32)
    for g in range(3):
        out = out.at[:, g * Hp: g * Hp + H].set(w_t[:, g * H:(g + 1) * H])
    return out


def encoder_forward(x_bti, w_ih, w_hh, b_ih, b_hh):
    """Pallas GRU encoder (== torch.nn.GRU(..., batch_first=True, num_layers=1) h_n).

    x_bti: (batch, seq, input_size) f32
    w_ih : (3H, I) torch layout ; w_hh: (3H, H) ; b_ih, b_hh: (3H,)
    returns h_n of shape (1, batch, H)
    """
    B, T, I = x_bti.shape
    H = w_hh.shape[1]
    Hp = max(128, ((H + 127) // 128) * 128)        # lane-tile stride per gate

    x_f32 = x_bti.astype(jnp.float32)

    # ---- gate-strided, zero-padded parameters ------------------------------
    w_ih_p = _pad_gate_cols(jnp.transpose(w_ih).astype(jnp.float32), H, Hp)   # (I, 3Hp)
    w_hh_t = _pad_gate_cols(jnp.transpose(w_hh).astype(jnp.float32), H, Hp)   # (H, 3Hp)
    w_hh_p = jnp.zeros((Hp, 3 * Hp), jnp.float32).at[:H, :].set(w_hh_t)       # (Hp, 3Hp)
    b_ih_p = _pad_gate_cols(b_ih.reshape(1, 3 * H).astype(jnp.float32), H, Hp)  # (1, 3Hp)
    b_hh_p = _pad_gate_cols(b_hh.reshape(1, 3 * H).astype(jnp.float32), H, Hp)  # (1, 3Hp)

    # ---- hoisted input projection: one big matmul over all timesteps -------
    x_tbi = jnp.transpose(x_f32, (1, 0, 2))                                   # (T, B, I)
    gi_all = jnp.einsum('tbi,ig->tbg', x_tbi, w_ih_p,
                        preferred_element_type=jnp.float32) + b_ih_p          # (T, B, 3Hp)

    vmem_spec = pl.BlockSpec(memory_space=pltpu.MemorySpace.VMEM)

    cost = pl.CostEstimate(
        flops=2 * T * B * Hp * 3 * Hp + 12 * T * B * Hp,
        transcendentals=3 * T * B * Hp,
        bytes_accessed=(gi_all.size + w_hh_p.size + b_hh_p.size + B * Hp) * 4,
    )

    h_pad = pl.pallas_call(
        _gru_recurrence_kernel,
        out_shape=jax.ShapeDtypeStruct((B, Hp), jnp.float32),
        in_specs=[vmem_spec, vmem_spec, vmem_spec],
        out_specs=vmem_spec,
        cost_estimate=cost,
    )(gi_all, w_hh_p, b_hh_p)

    return h_pad[:, :H][None]                                                  # (1, B, H)


def _gru_reference(x_bti, w_ih, w_hh, b_ih, b_hh):
    """Pure-JAX reference matching torch.nn.GRU (num_layers=1, batch_first)."""
    B, T, I = x_bti.shape
    H = w_hh.shape[1]
    h = jnp.zeros((B, H), jnp.float32)
    for t in range(T):
        x_t = x_bti[:, t, :]
        gi = x_t @ w_ih.T + b_ih
        gh = h @ w_hh.T + b_hh
        r = jax.nn.sigmoid(gi[:, :H] + gh[:, :H])
        z = jax.nn.sigmoid(gi[:, H:2 * H] + gh[:, H:2 * H])
        n = jnp.tanh(gi[:, 2 * H:] + r * gh[:, 2 * H:])
        h = (1.0 - z) * n + z * h
    return h[None]  # (1, B, H)


if __name__ == "__main__":
    # Small shapes implied by the module: (batch, seq, input_size) -> state (1, batch, core_size)
    batch, seq, input_size, core_size = 4, 8, 6, 32

    key = jax.random.PRNGKey(0)
    k_x, k_wih, k_whh, k_bih, k_bhh = jax.random.split(key, 5)

    # Deterministic init mimicking torch.nn.GRU: U(-1/sqrt(H), 1/sqrt(H))
    bound = 1.0 / jnp.sqrt(jnp.float32(core_size))
    x = jax.random.normal(k_x, (batch, seq, input_size), dtype=jnp.float32)
    w_ih = jax.random.uniform(k_wih, (3 * core_size, input_size), minval=-bound, maxval=bound, dtype=jnp.float32)
    w_hh = jax.random.uniform(k_whh, (3 * core_size, core_size), minval=-bound, maxval=bound, dtype=jnp.float32)
    b_ih = jax.random.uniform(k_bih, (3 * core_size,), minval=-bound, maxval=bound, dtype=jnp.float32)
    b_hh = jax.random.uniform(k_bhh, (3 * core_size,), minval=-bound, maxval=bound, dtype=jnp.float32)

    state = encoder_forward(x, w_ih, w_hh, b_ih, b_hh)
    jax.block_until_ready(state)

    ref = _gru_reference(x, w_ih, w_hh, b_ih, b_hh)
    assert state.shape == (1, batch, core_size)
    assert jnp.allclose(state, ref, atol=1e-5, rtol=1e-5)

    print("KERNEL_OK")
</pallas_src>

<mosaic_0001>
module attributes {stable_mosaic.version = 11 : i64} {
  func.func @_gru_recurrence_kernel(%arg0: memref<8x4x384xf32, #tpu.memory_space<vmem>>, %arg1: memref<128x384xf32, #tpu.memory_space<vmem>>, %arg2: memref<1x384xf32, #tpu.memory_space<vmem>>, %arg3: memref<4x128xf32, #tpu.memory_space<vmem>>) attributes {dimension_semantics = [], scalar_prefetch = 0 : i64, scratch_operands = 0 : i64, tpu.core_type = #tpu.core_type<tc>} {
    %c0 = arith.constant 0 : index
    %c0_0 = arith.constant 0 : index
    %0 = vector.load %arg1[%c0, %c0_0] : memref<128x384xf32, #tpu.memory_space<vmem>>, vector<128x384xf32>
    %c0_1 = arith.constant 0 : index
    %c0_2 = arith.constant 0 : index
    %1 = vector.load %arg2[%c0_1, %c0_2] : memref<1x384xf32, #tpu.memory_space<vmem>>, vector<1x384xf32>
    %2 = vector.shape_cast %1 : vector<1x384xf32> to vector<1x384xf32>
    %3 = vector.broadcast %2 : vector<1x384xf32> to vector<4x384xf32>
    %cst = arith.constant 0.000000e+00 : f32
    %4 = vector.broadcast %cst : f32 to vector<4x128xf32>
    %c0_i32 = arith.constant 0 : i32
    %5 = arith.index_cast %c0_i32 : i32 to index
    %c0_3 = arith.constant 0 : index
    %c0_4 = arith.constant 0 : index
    %6 = vector.load %arg0[%5, %c0_3, %c0_4] : memref<8x4x384xf32, #tpu.memory_space<vmem>>, vector<1x4x384xf32>
    %7 = vector.shape_cast %6 : vector<1x4x384xf32> to vector<4x384xf32>
    %cst_5 = arith.constant dense<0.000000e+00> : vector<4x384xf32>
    %8 = tpu.matmul %4, %0, %cst_5 {dimension_numbers = #tpu.dot_dimension_numbers<[1], [0], [0], [1], [0, 0, 1, 1], [], []>} : vector<4x128xf32>, vector<128x384xf32>, vector<4x384xf32> -> vector<4x384xf32>
    %9 = arith.addf %8, %3 : vector<4x384xf32>
    %10 = vector.extract_strided_slice %7 {offsets = [0, 0], sizes = [4, 128], strides = [1, 1]} : vector<4x384xf32> to vector<4x128xf32>
    %11 = vector.extract_strided_slice %9 {offsets = [0, 0], sizes = [4, 128], strides = [1, 1]} : vector<4x384xf32> to vector<4x128xf32>
    %12 = arith.addf %10, %11 : vector<4x128xf32>
    %13 = arith.negf %12 : vector<4x128xf32>
    %14 = math.exp %13 : vector<4x128xf32>
    %cst_6 = arith.constant 1.000000e+00 : f32
    %15 = vector.broadcast %cst_6 : f32 to vector<4x128xf32>
    %16 = arith.addf %15, %14 : vector<4x128xf32>
    %17 = arith.divf %15, %16 : vector<4x128xf32>
    %18 = vector.extract_strided_slice %7 {offsets = [0, 128], sizes = [4, 128], strides = [1, 1]} : vector<4x384xf32> to vector<4x128xf32>
    %19 = vector.extract_strided_slice %9 {offsets = [0, 128], sizes = [4, 128], strides = [1, 1]} : vector<4x384xf32> to vector<4x128xf32>
    %20 = arith.addf %18, %19 : vector<4x128xf32>
    %21 = arith.negf %20 : vector<4x128xf32>
    %22 = math.exp %21 : vector<4x128xf32>
    %cst_7 = arith.constant 1.000000e+00 : f32
    %23 = vector.broadcast %cst_7 : f32 to vector<4x128xf32>
    %24 = arith.addf %23, %22 : vector<4x128xf32>
    %25 = arith.divf %23, %24 : vector<4x128xf32>
    %26 = vector.extract_strided_slice %7 {offsets = [0, 256], sizes = [4, 128], strides = [1, 1]} : vector<4x384xf32> to vector<4x128xf32>
    %27 = vector.extract_strided_slice %9 {offsets = [0, 256], sizes = [4, 128], strides = [1, 1]} : vector<4x384xf32> to vector<4x128xf32>
    %28 = arith.mulf %17, %27 : vector<4x128xf32>
    %29 = arith.addf %26, %28 : vector<4x128xf32>
    %30 = math.tanh %29 : vector<4x128xf32>
    %cst_8 = arith.constant 1.000000e+00 : f32
    %31 = vector.broadcast %cst_8 : f32 to vector<4x128xf32>
    %32 = arith.subf %31, %25 : vector<4x128xf32>
    %33 = arith.mulf %32, %30 : vector<4x128xf32>
    %34 = arith.mulf %25, %4 : vector<4x128xf32>
    %35 = arith.addf %33, %34 : vector<4x128xf32>
    %c1_i32 = arith.constant 1 : i32
    %36 = arith.index_cast %c1_i32 : i32 to index
    %c0_9 = arith.constant 0 : index
    %c0_10 = arith.constant 0 : index
    %37 = vector.load %arg0[%36, %c0_9, %c0_10] : memref<8x4x384xf32, #tpu.memory_space<vmem>>, vector<1x4x384xf32>
    %38 = vector.shape_cast %37 : vector<1x4x384xf32> to vector<4x384xf32>
    %cst_11 = arith.constant dense<0.000000e+00> : vector<4x384xf32>
    %39 = tpu.matmul %35, %0, %cst_11 {dimension_numbers = #tpu.dot_dimension_numbers<[1], [0], [0], [1], [0, 0, 1, 1], [], []>} : vector<4x128xf32>, vector<128x384xf32>, vector<4x384xf32> -> vector<4x384xf32>
    %40 = arith.addf %39, %3 : vector<4x384xf32>
    %41 = vector.extract_strided_slice %38 {offsets = [0, 0], sizes = [4, 128], strides = [1, 1]} : vector<4x384xf32> to vector<4x128xf32>
    %42 = vector.extract_strided_slice %40 {offsets = [0, 0], sizes = [4, 128], strides = [1, 1]} : vector<4x384xf32> to vector<4x128xf32>
    %43 = arith.addf %41, %42 : vector<4x128xf32>
    %44 = arith.negf %43 : vector<4x128xf32>
    %45 = math.exp %44 : vector<4x128xf32>
    %cst_12 = arith.constant 1.000000e+00 : f32
    %46 = vector.broadcast %cst_12 : f32 to vector<4x128xf32>
    %47 = arith.addf %46, %45 : vector<4x128xf32>
    %48 = arith.divf %46, %47 : vector<4x128xf32>
    %49 = vector.extract_strided_slice %38 {offsets = [0, 128], sizes = [4, 128], strides = [1, 1]} : vector<4x384xf32> to vector<4x128xf32>
    %50 = vector.extract_strided_slice %40 {offsets = [0, 128], sizes = [4, 128], strides = [1, 1]} : vector<4x384xf32> to vector<4x128xf32>
    %51 = arith.addf %49, %50 : vector<4x128xf32>
    %52 = arith.negf %51 : vector<4x128xf32>
    %53 = math.exp %52 : vector<4x128xf32>
    %cst_13 = arith.constant 1.000000e+00 : f32
    %54 = vector.broadcast %cst_13 : f32 to vector<4x128xf32>
    %55 = arith.addf %54, %53 : vector<4x128xf32>
    %56 = arith.divf %54, %55 : vector<4x128xf32>
    %57 = vector.extract_strided_slice %38 {offsets = [0, 256], sizes = [4, 128], strides = [1, 1]} : vector<4x384xf32> to vector<4x128xf32>
    %58 = vector.extract_strided_slice %40 {offsets = [0, 256], sizes = [4, 128], strides = [1, 1]} : vector<4x384xf32> to vector<4x128xf32>
    %59 = arith.mulf %48, %58 : vector<4x128xf32>
    %60 = arith.addf %57, %59 : vector<4x128xf32>
    %61 = math.tanh %60 : vector<4x128xf32>
    %cst_14 = arith.constant 1.000000e+00 : f32
    %62 = vector.broadcast %cst_14 : f32 to vector<4x128xf32>
    %63 = arith.subf %62, %56 : vector<4x128xf32>
    %64 = arith.mulf %63, %61 : vector<4x128xf32>
    %65 = arith.mulf %56, %35 : vector<4x128xf32>
    %66 = arith.addf %64, %65 : vector<4x128xf32>
    %c2_i32 = arith.constant 2 : i32
    %67 = arith.index_cast %c2_i32 : i32 to index
    %c0_15 = arith.constant 0 : index
    %c0_16 = arith.constant 0 : index
    %68 = vector.load %arg0[%67, %c0_15, %c0_16] : memref<8x4x384xf32, #tpu.memory_space<vmem>>, vector<1x4x384xf32>
    %69 = vector.shape_cast %68 : vector<1x4x384xf32> to vector<4x384xf32>
    %cst_17 = arith.constant dense<0.000000e+00> : vector<4x384xf32>
    %70 = tpu.matmul %66, %0, %cst_17 {dimension_numbers = #tpu.dot_dimension_numbers<[1], [0], [0], [1], [0, 0, 1, 1], [], []>} : vector<4x128xf32>, vector<128x384xf32>, vector<4x384xf32> -> vector<4x384xf32>
    %71 = arith.addf %70, %3 : vector<4x384xf32>
    %72 = vector.extract_strided_slice %69 {offsets = [0, 0], sizes = [4, 128], strides = [1, 1]} : vector<4x384xf32> to vector<4x128xf32>
    %73 = vector.extract_strided_slice %71 {offsets = [0, 0], sizes = [4, 128], strides = [1, 1]} : vector<4x384xf32> to vector<4x128xf32>
    %74 = arith.addf %72, %73 : vector<4x128xf32>
    %75 = arith.negf %74 : vector<4x128xf32>
    %76 = math.exp %75 : vector<4x128xf32>
    %cst_18 = arith.constant 1.000000e+00 : f32
    %77 = vector.broadcast %cst_18 : f32 to vector<4x128xf32>
    %78 = arith.addf %77, %76 : vector<4x128xf32>
    %79 = arith.divf %77, %78 : vector<4x128xf32>
    %80 = vector.extract_strided_slice %69 {offsets = [0, 128], sizes = [4, 128], strides = [1, 1]} : vector<4x384xf32> to vector<4x128xf32>
    %81 = vector.extract_strided_slice %71 {offsets = [0, 128], sizes = [4, 128], strides = [1, 1]} : vector<4x384xf32> to vector<4x128xf32>
    %82 = arith.addf %80, %81 : vector<4x128xf32>
    %83 = arith.negf %82 : vector<4x128xf32>
    %84 = math.exp %83 : vector<4x128xf32>
    %cst_19 = arith.constant 1.000000e+00 : f32
    %85 = vector.broadcast %cst_19 : f32 to vector<4x128xf32>
    %86 = arith.addf %85, %84 : vector<4x128xf32>
    %87 = arith.divf %85, %86 : vector<4x128xf32>
    %88 = vector.extract_strided_slice %69 {offsets = [0, 256], sizes = [4, 128], strides = [1, 1]} : vector<4x384xf32> to vector<4x128xf32>
    %89 = vector.extract_strided_slice %71 {offsets = [0, 256], sizes = [4, 128], strides = [1, 1]} : vector<4x384xf32> to vector<4x128xf32>
    %90 = arith.mulf %79, %89 : vector<4x128xf32>
    %91 = arith.addf %88, %90 : vector<4x128xf32>
    %92 = math.tanh %91 : vector<4x128xf32>
    %cst_20 = arith.constant 1.000000e+00 : f32
    %93 = vector.broadcast %cst_20 : f32 to vector<4x128xf32>
    %94 = arith.subf %93, %87 : vector<4x128xf32>
    %95 = arith.mulf %94, %92 : vector<4x128xf32>
    %96 = arith.mulf %87, %66 : vector<4x128xf32>
    %97 = arith.addf %95, %96 : vector<4x128xf32>
    %c3_i32 = arith.constant 3 : i32
    %98 = arith.index_cast %c3_i32 : i32 to index
    %c0_21 = arith.constant 0 : index
    %c0_22 = arith.constant 0 : index
    %99 = vector.load %arg0[%98, %c0_21, %c0_22] : memref<8x4x384xf32, #tpu.memory_space<vmem>>, vector<1x4x384xf32>
    %100 = vector.shape_cast %99 : vector<1x4x384xf32> to vector<4x384xf32>
    %cst_23 = arith.constant dense<0.000000e+00> : vector<4x384xf32>
    %101 = tpu.matmul %97, %0, %cst_23 {dimension_numbers = #tpu.dot_dimension_numbers<[1], [0], [0], [1], [0, 0, 1, 1], [], []>} : vector<4x128xf32>, vector<128x384xf32>, vector<4x384xf32> -> vector<4x384xf32>
    %102 = arith.addf %101, %3 : vector<4x384xf32>
    %103 = vector.extract_strided_slice %100 {offsets = [0, 0], sizes = [4, 128], strides = [1, 1]} : vector<4x384xf32> to vector<4x128xf32>
    %104 = vector.extract_strided_slice %102 {offsets = [0, 0], sizes = [4, 128], strides = [1, 1]} : vector<4x384xf32> to vector<4x128xf32>
    %105 = arith.addf %103, %104 : vector<4x128xf32>
    %106 = arith.negf %105 : vector<4x128xf32>
    %107 = math.exp %106 : vector<4x128xf32>
    %cst_24 = arith.constant 1.000000e+00 : f32
    %108 = vector.broadcast %cst_24 : f32 to vector<4x128xf32>
    %109 = arith.addf %108, %107 : vector<4x128xf32>
    %110 = arith.divf %108, %109 : vector<4x128xf32>
    %111 = vector.extract_strided_slice %100 {offsets = [0, 128], sizes = [4, 128], strides = [1, 1]} : vector<4x384xf32> to vector<4x128xf32>
    %112 = vector.extract_strided_slice %102 {offsets = [0, 128], sizes = [4, 128], strides = [1, 1]} : vector<4x384xf32> to vector<4x128xf32>
    %113 = arith.addf %111, %112 : vector<4x128xf32>
    %114 = arith.negf %113 : vector<4x128xf32>
    %115 = math.exp %114 : vector<4x128xf32>
    %cst_25 = arith.constant 1.000000e+00 : f32
    %116 = vector.broadcast %cst_25 : f32 to vector<4x128xf32>
    %117 = arith.addf %116, %115 : vector<4x128xf32>
    %118 = arith.divf %116, %117 : vector<4x128xf32>
    %119 = vector.extract_strided_slice %100 {offsets = [0, 256], sizes = [4, 128], strides = [1, 1]} : vector<4x384xf32> to vector<4x128xf32>
    %120 = vector.extract_strided_slice %102 {offsets = [0, 256], sizes = [4, 128], strides = [1, 1]} : vector<4x384xf32> to vector<4x128xf32>
    %121 = arith.mulf %110, %120 : vector<4x128xf32>
    %122 = arith.addf %119, %121 : vector<4x128xf32>
    %123 = math.tanh %122 : vector<4x128xf32>
    %cst_26 = arith.constant 1.000000e+00 : f32
    %124 = vector.broadcast %cst_26 : f32 to vector<4x128xf32>
    %125 = arith.subf %124, %118 : vector<4x128xf32>
    %126 = arith.mulf %125, %123 : vector<4x128xf32>
    %127 = arith.mulf %118, %97 : vector<4x128xf32>
    %128 = arith.addf %126, %127 : vector<4x128xf32>
    %c4_i32 = arith.constant 4 : i32
    %129 = arith.index_cast %c4_i32 : i32 to index
    %c0_27 = arith.constant 0 : index
    %c0_28 = arith.constant 0 : index
    %130 = vector.load %arg0[%129, %c0_27, %c0_28] : memref<8x4x384xf32, #tpu.memory_space<vmem>>, vector<1x4x384xf32>
    %131 = vector.shape_cast %130 : vector<1x4x384xf32> to vector<4x384xf32>
    %cst_29 = arith.constant dense<0.000000e+00> : vector<4x384xf32>
    %132 = tpu.matmul %128, %0, %cst_29 {dimension_numbers = #tpu.dot_dimension_numbers<[1], [0], [0], [1], [0, 0, 1, 1], [], []>} : vector<4x128xf32>, vector<128x384xf32>, vector<4x384xf32> -> vector<4x384xf32>
    %133 = arith.addf %132, %3 : vector<4x384xf32>
    %134 = vector.extract_strided_slice %131 {offsets = [0, 0], sizes = [4, 128], strides = [1, 1]} : vector<4x384xf32> to vector<4x128xf32>
    %135 = vector.extract_strided_slice %133 {offsets = [0, 0], sizes = [4, 128], strides = [1, 1]} : vector<4x384xf32> to vector<4x128xf32>
    %136 = arith.addf %134, %135 : vector<4x128xf32>
    %137 = arith.negf %136 : vector<4x128xf32>
    %138 = math.exp %137 : vector<4x128xf32>
    %cst_30 = arith.constant 1.000000e+00 : f32
    %139 = vector.broadcast %cst_30 : f32 to vector<4x128xf32>
    %140 = arith.addf %139, %138 : vector<4x128xf32>
    %141 = arith.divf %139, %140 : vector<4x128xf32>
    %142 = vector.extract_strided_slice %131 {offsets = [0, 128], sizes = [4, 128], strides = [1, 1]} : vector<4x384xf32> to vector<4x128xf32>
    %143 = vector.extract_strided_slice %133 {offsets = [0, 128], sizes = [4, 128], strides = [1, 1]} : vector<4x384xf32> to vector<4x128xf32>
    %144 = arith.addf %142, %143 : vector<4x128xf32>
    %145 = arith.negf %144 : vector<4x128xf32>
    %146 = math.exp %145 : vector<4x128xf32>
    %cst_31 = arith.constant 1.000000e+00 : f32
    %147 = vector.broadcast %cst_31 : f32 to vector<4x128xf32>
    %148 = arith.addf %147, %146 : vector<4x128xf32>
    %149 = arith.divf %147, %148 : vector<4x128xf32>
    %150 = vector.extract_strided_slice %131 {offsets = [0, 256], sizes = [4, 128], strides = [1, 1]} : vector<4x384xf32> to vector<4x128xf32>
    %151 = vector.extract_strided_slice %133 {offsets = [0, 256], sizes = [4, 128], strides = [1, 1]} : vector<4x384xf32> to vector<4x128xf32>
    %152 = arith.mulf %141, %151 : vector<4x128xf32>
    %153 = arith.addf %150, %152 : vector<4x128xf32>
    %154 = math.tanh %153 : vector<4x128xf32>
    %cst_32 = arith.constant 1.000000e+00 : f32
    %155 = vector.broadcast %cst_32 : f32 to vector<4x128xf32>
    %156 = arith.subf %155, %149 : vector<4x128xf32>
    %157 = arith.mulf %156, %154 : vector<4x128xf32>
    %158 = arith.mulf %149, %128 : vector<4x128xf32>
    %159 = arith.addf %157, %158 : vector<4x128xf32>
    %c5_i32 = arith.constant 5 : i32
    %160 = arith.index_cast %c5_i32 : i32 to index
    %c0_33 = arith.constant 0 : index
    %c0_34 = arith.constant 0 : index
    %161 = vector.load %arg0[%160, %c0_33, %c0_34] : memref<8x4x384xf32, #tpu.memory_space<vmem>>, vector<1x4x384xf32>
    %162 = vector.shape_cast %161 : vector<1x4x384xf32> to vector<4x384xf32>
    %cst_35 = arith.constant dense<0.000000e+00> : vector<4x384xf32>
    %163 = tpu.matmul %159, %0, %cst_35 {dimension_numbers = #tpu.dot_dimension_numbers<[1], [0], [0], [1], [0, 0, 1, 1], [], []>} : vector<4x128xf32>, vector<128x384xf32>, vector<4x384xf32> -> vector<4x384xf32>
    %164 = arith.addf %163, %3 : vector<4x384xf32>
    %165 = vector.extract_strided_slice %162 {offsets = [0, 0], sizes = [4, 128], strides = [1, 1]} : vector<4x384xf32> to vector<4x128xf32>
    %166 = vector.extract_strided_slice %164 {offsets = [0, 0], sizes = [4, 128], strides = [1, 1]} : vector<4x384xf32> to vector<4x128xf32>
    %167 = arith.addf %165, %166 : vector<4x128xf32>
    %168 = arith.negf %167 : vector<4x128xf32>
    %169 = math.exp %168 : vector<4x128xf32>
    %cst_36 = arith.constant 1.000000e+00 : f32
    %170 = vector.broadcast %cst_36 : f32 to vector<4x128xf32>
    %171 = arith.addf %170, %169 : vector<4x128xf32>
    %172 = arith.divf %170, %171 : vector<4x128xf32>
    %173 = vector.extract_strided_slice %162 {offsets = [0, 128], sizes = [4, 128], strides = [1, 1]} : vector<4x384xf32> to vector<4x128xf32>
    %174 = vector.extract_strided_slice %164 {offsets = [0, 128], sizes = [4, 128], strides = [1, 1]} : vector<4x384xf32> to vector<4x128xf32>
    %175 = arith.addf %173, %174 : vector<4x128xf32>
    %176 = arith.negf %175 : vector<4x128xf32>
    %177 = math.exp %176 : vector<4x128xf32>
    %cst_37 = arith.constant 1.000000e+00 : f32
    %178 = vector.broadcast %cst_37 : f32 to vector<4x128xf32>
    %179 = arith.addf %178, %177 : vector<4x128xf32>
    %180 = arith.divf %178, %179 : vector<4x128xf32>
    %181 = vector.extract_strided_slice %162 {offsets = [0, 256], sizes = [4, 128], strides = [1, 1]} : vector<4x384xf32> to vector<4x128xf32>
    %182 = vector.extract_strided_slice %164 {offsets = [0, 256], sizes = [4, 128], strides = [1, 1]} : vector<4x384xf32> to vector<4x128xf32>
    %183 = arith.mulf %172, %182 : vector<4x128xf32>
    %184 = arith.addf %181, %183 : vector<4x128xf32>
    %185 = math.tanh %184 : vector<4x128xf32>
    %cst_38 = arith.constant 1.000000e+00 : f32
    %186 = vector.broadcast %cst_38 : f32 to vector<4x128xf32>
    %187 = arith.subf %186, %180 : vector<4x128xf32>
    %188 = arith.mulf %187, %185 : vector<4x128xf32>
    %189 = arith.mulf %180, %159 : vector<4x128xf32>
    %190 = arith.addf %188, %189 : vector<4x128xf32>
    %c6_i32 = arith.constant 6 : i32
    %191 = arith.index_cast %c6_i32 : i32 to index
    %c0_39 = arith.constant 0 : index
    %c0_40 = arith.constant 0 : index
    %192 = vector.load %arg0[%191, %c0_39, %c0_40] : memref<8x4x384xf32, #tpu.memory_space<vmem>>, vector<1x4x384xf32>
    %193 = vector.shape_cast %192 : vector<1x4x384xf32> to vector<4x384xf32>
    %cst_41 = arith.constant dense<0.000000e+00> : vector<4x384xf32>
    %194 = tpu.matmul %190, %0, %cst_41 {dimension_numbers = #tpu.dot_dimension_numbers<[1], [0], [0], [1], [0, 0, 1, 1], [], []>} : vector<4x128xf32>, vector<128x384xf32>, vector<4x384xf32> -> vector<4x384xf32>
    %195 = arith.addf %194, %3 : vector<4x384xf32>
    %196 = vector.extract_strided_slice %193 {offsets = [0, 0], sizes = [4, 128], strides = [1, 1]} : vector<4x384xf32> to vector<4x128xf32>
    %197 = vector.extract_strided_slice %195 {offsets = [0, 0], sizes = [4, 128], strides = [1, 1]} : vector<4x384xf32> to vector<4x128xf32>
    %198 = arith.addf %196, %197 : vector<4x128xf32>
    %199 = arith.negf %198 : vector<4x128xf32>
    %200 = math.exp %199 : vector<4x128xf32>
    %cst_42 = arith.constant 1.000000e+00 : f32
    %201 = vector.broadcast %cst_42 : f32 to vector<4x128xf32>
    %202 = arith.addf %201, %200 : vector<4x128xf32>
    %203 = arith.divf %201, %202 : vector<4x128xf32>
    %204 = vector.extract_strided_slice %193 {offsets = [0, 128], sizes = [4, 128], strides = [1, 1]} : vector<4x384xf32> to vector<4x128xf32>
    %205 = vector.extract_strided_slice %195 {offsets = [0, 128], sizes = [4, 128], strides = [1, 1]} : vector<4x384xf32> to vector<4x128xf32>
    %206 = arith.addf %204, %205 : vector<4x128xf32>
    %207 = arith.negf %206 : vector<4x128xf32>
    %208 = math.exp %207 : vector<4x128xf32>
    %cst_43 = arith.constant 1.000000e+00 : f32
    %209 = vector.broadcast %cst_43 : f32 to vector<4x128xf32>
    %210 = arith.addf %209, %208 : vector<4x128xf32>
    %211 = arith.divf %209, %210 : vector<4x128xf32>
    %212 = vector.extract_strided_slice %193 {offsets = [0, 256], sizes = [4, 128], strides = [1, 1]} : vector<4x384xf32> to vector<4x128xf32>
    %213 = vector.extract_strided_slice %195 {offsets = [0, 256], sizes = [4, 128], strides = [1, 1]} : vector<4x384xf32> to vector<4x128xf32>
    %214 = arith.mulf %203, %213 : vector<4x128xf32>
    %215 = arith.addf %212, %214 : vector<4x128xf32>
    %216 = math.tanh %215 : vector<4x128xf32>
    %cst_44 = arith.constant 1.000000e+00 : f32
    %217 = vector.broadcast %cst_44 : f32 to vector<4x128xf32>
    %218 = arith.subf %217, %211 : vector<4x128xf32>
    %219 = arith.mulf %218, %216 : vector<4x128xf32>
    %220 = arith.mulf %211, %190 : vector<4x128xf32>
    %221 = arith.addf %219, %220 : vector<4x128xf32>
    %c7_i32 = arith.constant 7 : i32
    %222 = arith.index_cast %c7_i32 : i32 to index
    %c0_45 = arith.constant 0 : index
    %c0_46 = arith.constant 0 : index
    %223 = vector.load %arg0[%222, %c0_45, %c0_46] : memref<8x4x384xf32, #tpu.memory_space<vmem>>, vector<1x4x384xf32>
    %224 = vector.shape_cast %223 : vector<1x4x384xf32> to vector<4x384xf32>
    %cst_47 = arith.constant dense<0.000000e+00> : vector<4x384xf32>
    %225 = tpu.matmul %221, %0, %cst_47 {dimension_numbers = #tpu.dot_dimension_numbers<[1], [0], [0], [1], [0, 0, 1, 1], [], []>} : vector<4x128xf32>, vector<128x384xf32>, vector<4x384xf32> -> vector<4x384xf32>
    %226 = arith.addf %225, %3 : vector<4x384xf32>
    %227 = vector.extract_strided_slice %224 {offsets = [0, 0], sizes = [4, 128], strides = [1, 1]} : vector<4x384xf32> to vector<4x128xf32>
    %228 = vector.extract_strided_slice %226 {offsets = [0, 0], sizes = [4, 128], strides = [1, 1]} : vector<4x384xf32> to vector<4x128xf32>
    %229 = arith.addf %227, %228 : vector<4x128xf32>
    %230 = arith.negf %229 : vector<4x128xf32>
    %231 = math.exp %230 : vector<4x128xf32>
    %cst_48 = arith.constant 1.000000e+00 : f32
    %232 = vector.broadcast %cst_48 : f32 to vector<4x128xf32>
    %233 = arith.addf %232, %231 : vector<4x128xf32>
    %234 = arith.divf %232, %233 : vector<4x128xf32>
    %235 = vector.extract_strided_slice %224 {offsets = [0, 128], sizes = [4, 128], strides = [1, 1]} : vector<4x384xf32> to vector<4x128xf32>
    %236 = vector.extract_strided_slice %226 {offsets = [0, 128], sizes = [4, 128], strides = [1, 1]} : vector<4x384xf32> to vector<4x128xf32>
    %237 = arith.addf %235, %236 : vector<4x128xf32>
    %238 = arith.negf %237 : vector<4x128xf32>
    %239 = math.exp %238 : vector<4x128xf32>
    %cst_49 = arith.constant 1.000000e+00 : f32
    %240 = vector.broadcast %cst_49 : f32 to vector<4x128xf32>
    %241 = arith.addf %240, %239 : vector<4x128xf32>
    %242 = arith.divf %240, %241 : vector<4x128xf32>
    %243 = vector.extract_strided_slice %224 {offsets = [0, 256], sizes = [4, 128], strides = [1, 1]} : vector<4x384xf32> to vector<4x128xf32>
    %244 = vector.extract_strided_slice %226 {offsets = [0, 256], sizes = [4, 128], strides = [1, 1]} : vector<4x384xf32> to vector<4x128xf32>
    %245 = arith.mulf %234, %244 : vector<4x128xf32>
    %246 = arith.addf %243, %245 : vector<4x128xf32>
    %247 = math.tanh %246 : vector<4x128xf32>
    %cst_50 = arith.constant 1.000000e+00 : f32
    %248 = vector.broadcast %cst_50 : f32 to vector<4x128xf32>
    %249 = arith.subf %248, %242 : vector<4x128xf32>
    %250 = arith.mulf %249, %247 : vector<4x128xf32>
    %251 = arith.mulf %242, %221 : vector<4x128xf32>
    %252 = arith.addf %250, %251 : vector<4x128xf32>
    %c8_i32 = arith.constant 8 : i32
    %c0_51 = arith.constant 0 : index
    %c0_52 = arith.constant 0 : index
    %253 = vector.load %arg3[%c0_51, %c0_52] : memref<4x128xf32, #tpu.memory_space<vmem>>, vector<4x128xf32>
    tpu.vector_store %arg3[%c0_51, %c0_52], %252 {strides = array<i32>} : memref<4x128xf32, #tpu.memory_space<vmem>>, vector<4x128xf32>,
    return
  }
}

</mosaic_0001>

<llo_original>
// kernel: tpu_custom_call.1
$region0: #{tpu_custom_call.1}
  #allocation0 [shape = 'u32[]', space=smem, size = 0x4, offset = 0x4, fixed_abs, tag = 'smem constant byte address 0x4 - core index']
  #allocation1 [shape = 'u32[144,128]{1,0:T(1,128)}', space=vmem, size = 0x12000, scoped, tag = 'internal scratch']
  %s0 = inlined_call_operand.hbm [shape: f32[8,4,384], index: 0, kind: input, shape index: {}]
  %s1 = inlined_call_operand.hbm [shape: f32[128,384], index: 1, kind: input, shape index: {}]
  %s2 = inlined_call_operand.vmem [shape: f32[1,384], index: 2, kind: input, shape index: {}]
  %s3 = inlined_call_operand.hbm [shape: f32[4,128], index: 3, kind: output, shape index: {}]
  %s4 = sld [smem:[#allocation0]]
  $region30: #{tpu_custom_call.1} parent=0
    _
  %s6 = ssub.s32 1, %s4
  %s7 = scalar_select 0, %s6, %s4
  $region1: #{tpu_custom_call.1} parent=0
    #allocation2 [shape = 'u8[49152]{0}', space=vmem, size = 0xc000, scoped, tag = 'input window, operand 0, single buffered']
    #allocation3 [shape = 's32[1]{0}', space=sflag, size = 0x4, scoped, tag = 'scoped memory for tpu_custom_call.1']
    #allocation4 [shape = 's32[1]{0}', space=sflag, size = 0x4, scoped, tag = 'scoped memory for tpu_custom_call.1']
    #allocation5 [shape = 'u8[196608]{0}', space=vmem, size = 0x30000, scoped, tag = 'input window, operand 1, single buffered']
    #allocation6 [shape = 's32[1]{0}', space=sflag, size = 0x4, scoped, tag = 'scoped memory for tpu_custom_call.1']
    #allocation7 [shape = 'u8[2048]{0}', space=vmem, size = 0x800, scoped, tag = 'output window, operand 0, single buffered']
    %8 = vsyncpa [#allocation3], 0
    %9 = vsyncpa [#allocation6], 0
    %10 = vsyncpa [#allocation4], 0
    // Predicated region
    $region2: #{tpu_custom_call.1} parent=1 // pred_check
      _
    $region3: #{tpu_custom_call.1} parent=1 // pred_check_branch
      %12 = sbr.rel (0) target = $region5
    $region4: #{tpu_custom_call.1} parent=1 // pred_region
      %s14 = ssub.s32 1536, 1536
      %15 = vsyncadd [#allocation3], %s14
      %s16 = sshll.u32 [#allocation2], 4
      %s17 = int_to_ptr.vmem [resolvable:$true] %s16
      %22 = dma.hbm_to_vmem [thread:$0]  %s0, 1536, %s17, [#allocation3], 192, 192, 12
    $region5: #{tpu_custom_call.1} parent=1 // pred_fallthru
      _
    // Predicated region
    $region6: #{tpu_custom_call.1} parent=1 // pred_check
      _
    $region7: #{tpu_custom_call.1} parent=1 // pred_check_branch
      %24 = sbr.rel (0) target = $region9
    $region8: #{tpu_custom_call.1} parent=1 // pred_region
      %s26 = ssub.s32 6144, 6144
      %27 = vsyncadd [#allocation6], %s26
      %s28 = sshll.u32 [#allocation5], 4
      %s29 = int_to_ptr.vmem [resolvable:$true] %s28
      %34 = dma.hbm_to_vmem [thread:$0]  %s1, 6144, %s29, [#allocation6], 384, 384, 24
    $region9: #{tpu_custom_call.1} parent=1 // pred_fallthru
      _
    // Predicated region
    $region10: #{tpu_custom_call.1} parent=1 // pred_check
      _
    $region11: #{tpu_custom_call.1} parent=1 // pred_check_branch
      %36 = sbr.rel (0) target = $region13
    $region12: #{tpu_custom_call.1} parent=1 // pred_region
      _
    $region13: #{tpu_custom_call.1} parent=1 // pred_fallthru
      _
    // Predicated region
    $region14: #{tpu_custom_call.1} parent=1 // pred_check
      _
    $region15: #{tpu_custom_call.1} parent=1 // pred_check_branch
      %38 = sbr.rel (0) target = $region17
    $region16: #{tpu_custom_call.1} parent=1 // pred_region
      %39 = dma.done [#allocation3], 1536
    $region17: #{tpu_custom_call.1} parent=1 // pred_fallthru
      _
    // Predicated region
    $region18: #{tpu_custom_call.1} parent=1 // pred_check
      _
    $region19: #{tpu_custom_call.1} parent=1 // pred_check_branch
      %41 = sbr.rel (0) target = $region21
    $region20: #{tpu_custom_call.1} parent=1 // pred_region
      %42 = dma.done [#allocation6], 6144
    $region21: #{tpu_custom_call.1} parent=1 // pred_fallthru
      _
    %v43 = vld [vmem:[#allocation5] sm:$0xff]
    %v44 = vld [vmem:[#allocation5 + $0x8] sm:$0xff]
    %v45 = vld [vmem:[#allocation5 + $0x10] sm:$0xff]
    %v46 = vld [vmem:[#allocation5 + $0x18] sm:$0xff]
    %v47 = vld [vmem:[#allocation5 + $0x20] sm:$0xff]
    %v48 = vld [vmem:[#allocation5 + $0x28] sm:$0xff]
    %v49 = vld [vmem:[#allocation5 + $0x30] sm:$0xff]
    %v50 = vld [vmem:[#allocation5 + $0x38] sm:$0xff]
    %v51 = vld [vmem:[#allocation5 + $0x40] sm:$0xff]
    %v52 = vld [vmem:[#allocation5 + $0x48] sm:$0xff]
    %v53 = vld [vmem:[#allocation5 + $0x50] sm:$0xff]
    %v54 = vld [vmem:[#allocation5 + $0x58] sm:$0xff]
    %v55 = vld [vmem:[#allocation5 + $0x60] sm:$0xff]
    %v56 = vld [vmem:[#allocation5 + $0x68] sm:$0xff]
    %v57 = vld [vmem:[#allocation5 + $0x70] sm:$0xff]
    %v58 = vld [vmem:[#allocation5 + $0x78] sm:$0xff]
    %v59 = vld [vmem:[#allocation5 + $0x80] sm:$0xff]
    %v60 = vld [vmem:[#allocation5 + $0x88] sm:$0xff]
    %v61 = vld [vmem:[#allocation5 + $0x90] sm:$0xff]
    %v62 = vld [vmem:[#allocation5 + $0x98] sm:$0xff]
    %v63 = vld [vmem:[#allocation5 + $0xa0] sm:$0xff]
    %v64 = vld [vmem:[#allocation5 + $0xa8] sm:$0xff]
    %v65 = vld [vmem:[#allocation5 + $0xb0] sm:$0xff]
    %v66 = vld [vmem:[#allocation5 + $0xb8] sm:$0xff]
    %v67 = vld [vmem:[#allocation5 + $0xc0] sm:$0xff]
    %v68 = vld [vmem:[#allocation5 + $0xc8] sm:$0xff]
    %v69 = vld [vmem:[#allocation5 + $0xd0] sm:$0xff]
    %v70 = vld [vmem:[#allocation5 + $0xd8] sm:$0xff]
    %v71 = vld [vmem:[#allocation5 + $0xe0] sm:$0xff]
    %v72 = vld [vmem:[#allocation5 + $0xe8] sm:$0xff]
    %v73 = vld [vmem:[#allocation5 + $0xf0] sm:$0xff]
    %v74 = vld [vmem:[#allocation5 + $0xf8] sm:$0xff]
    %v75 = vld [vmem:[#allocation5 + $0x100] sm:$0xff]
    %v76 = vld [vmem:[#allocation5 + $0x108] sm:$0xff]
    %v77 = vld [vmem:[#allocation5 + $0x110] sm:$0xff]
    %v78 = vld [vmem:[#allocation5 + $0x118] sm:$0xff]
    %v79 = vld [vmem:[#allocation5 + $0x120] sm:$0xff]
    %v80 = vld [vmem:[#allocation5 + $0x128] sm:$0xff]
    %v81 = vld [vmem:[#allocation5 + $0x130] sm:$0xff]
    %v82 = vld [vmem:[#allocation5 + $0x138] sm:$0xff]
    %v83 = vld [vmem:[#allocation5 + $0x140] sm:$0xff]
    %v84 = vld [vmem:[#allocation5 + $0x148] sm:$0xff]
    %v85 = vld [vmem:[#allocation5 + $0x150] sm:$0xff]
    %v86 = vld [vmem:[#allocation5 + $0x158] sm:$0xff]
    %v87 = vld [vmem:[#allocation5 + $0x160] sm:$0xff]
    %v88 = vld [vmem:[#allocation5 + $0x168] sm:$0xff]
    %v89 = vld [vmem:[#allocation5 + $0x170] sm:$0xff]
    %v90 = vld [vmem:[#allocation5 + $0x178] sm:$0xff]
    %v91 = vld [vmem:[%s2] sm:$0x7]
    %v93 = vlaneseq
    %v94 = vshrl.u32 %v93, 7
    %v95 = vsub.s32 0, %v94
    %v96 = vrot.slane %v91, %v95
    %v97 = vlaneseq
    %v98 = vshrl.u32 %v97, 7
    %v99 = vsub.s32 1, %v98
    %v100 = vrot.slane %v91, %v99
    %v101 = vlaneseq
    %v102 = vshrl.u32 %v101, 7
    %v103 = vsub.s32 2, %v102
    %v104 = vrot.slane %v91, %v103
    %v108 = vld [vmem:[#allocation2] sm:$0xff]
    %v109 = vld [vmem:[#allocation2 + $0x8] sm:$0xf]
    %110 = vmatprep.subr.mxu0 %v44
    %111 = vmatpush1.msra.mxu0 %v43
    %112 = vmatprep.subr.mxu0 %v47
    %113 = vmatpush1.msra.mxu0 %v46
    %114 = vmatprep.subr.mxu0 %v50
    %115 = vmatpush1.msra.mxu0 %v49
    %116 = vmatprep.subr.mxu0 %v53
    %117 = vmatpush1.msra.mxu0 %v52
    %118 = vmatprep.subr.mxu0 %v56
    %119 = vmatpush1.msra.mxu0 %v55
    %120 = vmatprep.subr.mxu0 %v59
    %121 = vmatpush1.msra.mxu0 %v58
    %122 = vmatprep.subr.mxu0 %v62
    %123 = vmatpush1.msra.mxu0 %v61
    %124 = vmatprep.subr.mxu0 %v65
    %125 = vmatpush1.msra.mxu0 %v64
    %126 = vmatprep.subr.mxu0 %v68
    %127 = vmatpush1.msra.mxu0 %v67
    %128 = vmatprep.subr.mxu0 %v71
    %129 = vmatpush1.msra.mxu0 %v70
    %130 = vmatprep.subr.mxu0 %v74
    %131 = vmatpush1.msra.mxu0 %v73
    %132 = vmatprep.subr.mxu0 %v77
    %133 = vmatpush1.msra.mxu0 %v76
    %134 = vmatprep.subr.mxu0 %v80
    %135 = vmatpush1.msra.mxu0 %v79
    %136 = vmatprep.subr.mxu0 %v83
    %137 = vmatpush1.msra.mxu0 %v82
    %138 = vmatprep.subr.mxu0 %v86
    %139 = vmatpush1.msra.mxu0 %v85
    %140 = vmatprep.subr.mxu0 %v89
    %141 = vmatpush1.msra.mxu0 %v88
    %142 = vmatprep.subr.mxu0 0.0
    %143 = vmatpush1.msra.mxu0 0.0
    %144 = vmatprep.subr.mxu0 0.0
    %145 = vmatpush1.msra.mxu0 0.0
    %146 = vmatprep.subr.mxu0 0.0
    %147 = vmatpush1.msra.mxu0 0.0
    %148 = vmatprep.subr.mxu0 0.0
    %149 = vmatpush1.msra.mxu0 0.0
    %150 = vmatprep.subr.mxu0 0.0
    %151 = vmatpush1.msra.mxu0 0.0
    %152 = vmatprep.subr.mxu0 0.0
    %153 = vmatpush1.msra.mxu0 0.0
    %154 = vmatprep.subr.mxu0 0.0
    %155 = vmatpush1.msra.mxu0 0.0
    %156 = vmatprep.subr.mxu0 0.0
    %157 = vmatpush1.msra.mxu0 0.0
    %158 = vmatprep.subr.mxu0 0.0
    %159 = vmatpush1.msra.mxu0 0.0
    %160 = vmatprep.subr.mxu0 0.0
    %161 = vmatpush1.msra.mxu0 0.0
    %162 = vmatprep.subr.mxu0 0.0
    %163 = vmatpush1.msra.mxu0 0.0
    %164 = vmatprep.subr.mxu0 0.0
    %165 = vmatpush1.msra.mxu0 0.0
    %166 = vmatprep.subr.mxu0 0.0
    %167 = vmatpush1.msra.mxu0 0.0
    %168 = vmatprep.subr.mxu0 0.0
    %169 = vmatpush1.msra.mxu0 0.0
    %170 = vmatprep.subr.mxu0 0.0
    %171 = vmatpush1.msra.mxu0 0.0
    %172 = vmatprep.subr.mxu0 0.0
    %173 = vmatpush1.msra.mxu0 0.0
    %174 = vmatprep.mubr.f32.mxu0 0.0
    %175 = vmatmul.mubr.f32.gmra.mrb[0].mxu0 0.0
    %v176 = vpop.f32.mrb[0].mxu0
    %v177 = vadd.f32 %v96, %v176
    %v178 = vpop.f32.mrb[0].mxu0
    %v179 = vadd.f32 %v100, %v178
    %180 = vdwg.mxu0
    %181 = vmatprep.subr.mxu0 0.0
    %182 = vmatpush1.msra.mxu0 %v45
    %183 = vmatprep.subr.mxu0 0.0
    %184 = vmatpush1.msra.mxu0 %v48
    %185 = vmatprep.subr.mxu0 0.0
    %186 = vmatpush1.msra.mxu0 %v51
    %187 = vmatprep.subr.mxu0 0.0
    %188 = vmatpush1.msra.mxu0 %v54
    %189 = vmatprep.subr.mxu0 0.0
    %190 = vmatpush1.msra.mxu0 %v57
    %191 = vmatprep.subr.mxu0 0.0
    %192 = vmatpush1.msra.mxu0 %v60
    %193 = vmatprep.subr.mxu0 0.0
    %194 = vmatpush1.msra.mxu0 %v63
    %195 = vmatprep.subr.mxu0 0.0
    %196 = vmatpush1.msra.mxu0 %v66
    %197 = vmatprep.subr.mxu0 0.0
    %198 = vmatpush1.msra.mxu0 %v69
    %199 = vmatprep.subr.mxu0 0.0
    %200 = vmatpush1.msra.mxu0 %v72
    %201 = vmatprep.subr.mxu0 0.0
    %202 = vmatpush1.msra.mxu0 %v75
    %203 = vmatprep.subr.mxu0 0.0
    %204 = vmatpush1.msra.mxu0 %v78
    %205 = vmatprep.subr.mxu0 0.0
    %206 = vmatpush1.msra.mxu0 %v81
    %207 = vmatprep.subr.mxu0 0.0
    %208 = vmatpush1.msra.mxu0 %v84
    %209 = vmatprep.subr.mxu0 0.0
    %210 = vmatpush1.msra.mxu0 %v87
    %211 = vmatprep.subr.mxu0 0.0
    %212 = vmatpush1.msra.mxu0 %v90
    %213 = vmatprep.subr.mxu0 0.0
    %214 = vmatpush1.msra.mxu0 0.0
    %215 = vmatprep.subr.mxu0 0.0
    %216 = vmatpush1.msra.mxu0 0.0
    %217 = vmatprep.subr.mxu0 0.0
    %218 = vmatpush1.msra.mxu0 0.0
    %219 = vmatprep.subr.mxu0 0.0
    %220 = vmatpush1.msra.mxu0 0.0
    %221 = vmatprep.subr.mxu0 0.0
    %222 = vmatpush1.msra.mxu0 0.0
    %223 = vmatprep.subr.mxu0 0.0
    %224 = vmatpush1.msra.mxu0 0.0
    %225 = vmatprep.subr.mxu0 0.0
    %226 = vmatpush1.msra.mxu0 0.0
    %227 = vmatprep.subr.mxu0 0.0
    %228 = vmatpush1.msra.mxu0 0.0
    %229 = vmatprep.subr.mxu0 0.0
    %230 = vmatpush1.msra.mxu0 0.0
    %231 = vmatprep.subr.mxu0 0.0
    %232 = vmatpush1.msra.mxu0 0.0
    %233 = vmatprep.subr.mxu0 0.0
    %234 = vmatpush1.msra.mxu0 0.0
    %235 = vmatprep.subr.mxu0 0.0
    %236 = vmatpush1.msra.mxu0 0.0
    %237 = vmatprep.subr.mxu0 0.0
    %238 = vmatpush1.msra.mxu0 0.0
    %239 = vmatprep.subr.mxu0 0.0
    %240 = vmatpush1.msra.mxu0 0.0
    %241 = vmatprep.subr.mxu0 0.0
    %242 = vmatpush1.msra.mxu0 0.0
    %243 = vmatprep.subr.mxu0 0.0
    %244 = vmatpush1.msra.mxu0 0.0
    %245 = vmatprep.mubr.f32.mxu0 0.0
    %246 = vmatmul.mubr.f32.gmra.mrb[0].mxu0 0.0
    %v247 = vpop.f32.mrb[0].mxu0
    %v248 = vadd.f32 %v104, %v247
    %v249 = vpop.f32.mrb[0].mxu0
    %250 = vdwg.mxu0
    %v251 = vadd.f32 %v108, %v177
    %v252 = vxor.u32 %v251, 2147483648
    %v253 = vmul.f32 %v252, 1.442695
    %v254 = vpow.pop %v253
    %v255 = vadd.f32 %v254, 1.0
    %v256 = vrcp.pop %v255
    %v257 = vmul.f32 1.0, %v256
    %v259 = vrot.slane %v108, 4
    %v261 = vadd.f32 %v259, %v179
    %v262 = vxor.u32 %v261, 2147483648
    %v263 = vmul.f32 %v262, 1.442695
    %v264 = vpow.pop %v263
    %v265 = vadd.f32 %v264, 1.0
    %v266 = vrcp.pop %v265
    %v267 = vmul.f32 1.0, %v266
    %v268 = vmul.f32 %v257, %v248
    %v269 = vadd.f32 %v109, %v268
    %v270 = vtanh.pop %v269
    %v271 = vsub.f32 1.0, %v267
    %v272 = vmul.f32 %v271, %v270
    %v273 = vmul.f32 %v267, 0.0
    %v274 = vadd.f32 %v272, %v273
    %s275 = scalar_lea.vmem [#allocation2], 12
    %v276 = vld [vmem:[%s275] sm:$0xff]
    %v277 = vld [vmem:[%s275 + $0x8] sm:$0xf]
    %278 = vmatprep.subr.mxu0 %v44
    %279 = vmatpush1.msra.mxu0 %v43
    %280 = vmatprep.subr.mxu0 %v47
    %281 = vmatpush1.msra.mxu0 %v46
    %282 = vmatprep.subr.mxu0 %v50
    %283 = vmatpush1.msra.mxu0 %v49
    %284 = vmatprep.subr.mxu0 %v53
    %285 = vmatpush1.msra.mxu0 %v52
    %286 = vmatprep.subr.mxu0 %v56
    %287 = vmatpush1.msra.mxu0 %v55
    %288 = vmatprep.subr.mxu0 %v59
    %289 = vmatpush1.msra.mxu0 %v58
    %290 = vmatprep.subr.mxu0 %v62
    %291 = vmatpush1.msra.mxu0 %v61
    %292 = vmatprep.subr.mxu0 %v65
    %293 = vmatpush1.msra.mxu0 %v64
    %294 = vmatprep.subr.mxu0 %v68
    %295 = vmatpush1.msra.mxu0 %v67
    %296 = vmatprep.subr.mxu0 %v71
    %297 = vmatpush1.msra.mxu0 %v70
    %298 = vmatprep.subr.mxu0 %v74
    %299 = vmatpush1.msra.mxu0 %v73
    %300 = vmatprep.subr.mxu0 %v77
    %301 = vmatpush1.msra.mxu0 %v76
    %302 = vmatprep.subr.mxu0 %v80
    %303 = vmatpush1.msra.mxu0 %v79
    %304 = vmatprep.subr.mxu0 %v83
    %305 = vmatpush1.msra.mxu0 %v82
    %306 = vmatprep.subr.mxu0 %v86
    %307 = vmatpush1.msra.mxu0 %v85
    %308 = vmatprep.subr.mxu0 %v89
    %309 = vmatpush1.msra.mxu0 %v88
    %310 = vmatprep.subr.mxu0 0.0
    %311 = vmatpush1.msra.mxu0 0.0
    %312 = vmatprep.subr.mxu0 0.0
    %313 = vmatpush1.msra.mxu0 0.0
    %314 = vmatprep.subr.mxu0 0.0
    %315 = vmatpush1.msra.mxu0 0.0
    %316 = vmatprep.subr.mxu0 0.0
    %317 = vmatpush1.msra.mxu0 0.0
    %318 = vmatprep.subr.mxu0 0.0
    %319 = vmatpush1.msra.mxu0 0.0
    %320 = vmatprep.subr.mxu0 0.0
    %321 = vmatpush1.msra.mxu0 0.0
    %322 = vmatprep.subr.mxu0 0.0
    %323 = vmatpush1.msra.mxu0 0.0
    %324 = vmatprep.subr.mxu0 0.0
    %325 = vmatpush1.msra.mxu0 0.0
    %326 = vmatprep.subr.mxu0 0.0
    %327 = vmatpush1.msra.mxu0 0.0
    %328 = vmatprep.subr.mxu0 0.0
    %329 = vmatpush1.msra.mxu0 0.0
    %330 = vmatprep.subr.mxu0 0.0
    %331 = vmatpush1.msra.mxu0 0.0
    %332 = vmatprep.subr.mxu0 0.0
    %333 = vmatpush1.msra.mxu0 0.0
    %334 = vmatprep.subr.mxu0 0.0
    %335 = vmatpush1.msra.mxu0 0.0
    %336 = vmatprep.subr.mxu0 0.0
    %337 = vmatpush1.msra.mxu0 0.0
    %338 = vmatprep.subr.mxu0 0.0
    %339 = vmatpush1.msra.mxu0 0.0
    %340 = vmatprep.subr.mxu0 0.0
    %341 = vmatpush1.msra.mxu0 0.0
    %342 = vmatprep.mubr.f32.mxu0 0.0
    %343 = vmatmul.mubr.f32.gmra.mrb[0].mxu0 %v274
    %v344 = vpop.f32.mrb[0].mxu0
    %v345 = vadd.f32 %v96, %v344
    %v346 = vpop.f32.mrb[0].mxu0
    %v347 = vadd.f32 %v100, %v346
    %348 = vdwg.mxu0
    %349 = vmatprep.subr.mxu0 0.0
    %350 = vmatpush1.msra.mxu0 %v45
    %351 = vmatprep.subr.mxu0 0.0
    %352 = vmatpush1.msra.mxu0 %v48
    %353 = vmatprep.subr.mxu0 0.0
    %354 = vmatpush1.msra.mxu0 %v51
    %355 = vmatprep.subr.mxu0 0.0
    %356 = vmatpush1.msra.mxu0 %v54
    %357 = vmatprep.subr.mxu0 0.0
    %358 = vmatpush1.msra.mxu0 %v57
    %359 = vmatprep.subr.mxu0 0.0
    %360 = vmatpush1.msra.mxu0 %v60
    %361 = vmatprep.subr.mxu0 0.0
    %362 = vmatpush1.msra.mxu0 %v63
    %363 = vmatprep.subr.mxu0 0.0
    %364 = vmatpush1.msra.mxu0 %v66
    %365 = vmatprep.subr.mxu0 0.0
    %366 = vmatpush1.msra.mxu0 %v69
    %367 = vmatprep.subr.mxu0 0.0
    %368 = vmatpush1.msra.mxu0 %v72
    %369 = vmatprep.subr.mxu0 0.0
    %370 = vmatpush1.msra.mxu0 %v75
    %371 = vmatprep.subr.mxu0 0.0
    %372 = vmatpush1.msra.mxu0 %v78
    %373 = vmatprep.subr.mxu0 0.0
    %374 = vmatpush1.msra.mxu0 %v81
    %375 = vmatprep.subr.mxu0 0.0
    %376 = vmatpush1.msra.mxu0 %v84
    %377 = vmatprep.subr.mxu0 0.0
    %378 = vmatpush1.msra.mxu0 %v87
    %379 = vmatprep.subr.mxu0 0.0
    %380 = vmatpush1.msra.mxu0 %v90
    %381 = vmatprep.subr.mxu0 0.0
    %382 = vmatpush1.msra.mxu0 0.0
    %383 = vmatprep.subr.mxu0 0.0
    %384 = vmatpush1.msra.mxu0 0.0
    %385 = vmatprep.subr.mxu0 0.0
    %386 = vmatpush1.msra.mxu0 0.0
    %387 = vmatprep.subr.mxu0 0.0
    %388 = vmatpush1.msra.mxu0 0.0
    %389 = vmatprep.subr.mxu0 0.0
    %390 = vmatpush1.msra.mxu0 0.0
    %391 = vmatprep.subr.mxu0 0.0
    %392 = vmatpush1.msra.mxu0 0.0
    %393 = vmatprep.subr.mxu0 0.0
    %394 = vmatpush1.msra.mxu0 0.0
    %395 = vmatprep.subr.mxu0 0.0
    %396 = vmatpush1.msra.mxu0 0.0
    %397 = vmatprep.subr.mxu0 0.0
    %398 = vmatpush1.msra.mxu0 0.0
    %399 = vmatprep.subr.mxu0 0.0
    %400 = vmatpush1.msra.mxu0 0.0
    %401 = vmatprep.subr.mxu0 0.0
    %402 = vmatpush1.msra.mxu0 0.0
    %403 = vmatprep.subr.mxu0 0.0
    %404 = vmatpush1.msra.mxu0 0.0
    %405 = vmatprep.subr.mxu0 0.0
    %406 = vmatpush1.msra.mxu0 0.0
    %407 = vmatprep.subr.mxu0 0.0
    %408 = vmatpush1.msra.mxu0 0.0
    %409 = vmatprep.subr.mxu0 0.0
    %410 = vmatpush1.msra.mxu0 0.0
    %411 = vmatprep.subr.mxu0 0.0
    %412 = vmatpush1.msra.mxu0 0.0
    %413 = vmatprep.mubr.f32.mxu0 0.0
    %414 = vmatmul.mubr.f32.gmra.mrb[0].mxu0 %v274
    %v415 = vpop.f32.mrb[0].mxu0
    %v416 = vadd.f32 %v104, %v415
    %v417 = vpop.f32.mrb[0].mxu0
    %418 = vdwg.mxu0
    %v419 = vadd.f32 %v276, %v345
    %v420 = vxor.u32 %v419, 2147483648
    %v421 = vmul.f32 %v420, 1.442695
    %v422 = vpow.pop %v421
    %v423 = vadd.f32 %v422, 1.0
    %v424 = vrcp.pop %v423
    %v425 = vmul.f32 1.0, %v424
    %v427 = vrot.slane %v276, 4
    %v429 = vadd.f32 %v427, %v347
    %v430 = vxor.u32 %v429, 2147483648
    %v431 = vmul.f32 %v430, 1.442695
    %v432 = vpow.pop %v431
    %v433 = vadd.f32 %v432, 1.0
    %v434 = vrcp.pop %v433
    %v435 = vmul.f32 1.0, %v434
    %v436 = vmul.f32 %v425, %v416
    %v437 = vadd.f32 %v277, %v436
    %v438 = vtanh.pop %v437
    %v439 = vsub.f32 1.0, %v435
    %v440 = vmul.f32 %v439, %v438
    %v441 = vmul.f32 %v435, %v274
    %v442 = vadd.f32 %v440, %v441
    %s443 = scalar_lea.vmem [#allocation2], 24
    %v444 = vld [vmem:[%s443] sm:$0xff]
    %v445 = vld [vmem:[%s443 + $0x8] sm:$0xf]
    %446 = vmatprep.subr.mxu0 %v44
    %447 = vmatpush1.msra.mxu0 %v43
    %448 = vmatprep.subr.mxu0 %v47
    %449 = vmatpush1.msra.mxu0 %v46
    %450 = vmatprep.subr.mxu0 %v50
    %451 = vmatpush1.msra.mxu0 %v49
    %452 = vmatprep.subr.mxu0 %v53
    %453 = vmatpush1.msra.mxu0 %v52
    %454 = vmatprep.subr.mxu0 %v56
    %455 = vmatpush1.msra.mxu0 %v55
    %456 = vmatprep.subr.mxu0 %v59
    %457 = vmatpush1.msra.mxu0 %v58
    %458 = vmatprep.subr.mxu0 %v62
    %459 = vmatpush1.msra.mxu0 %v61
    %460 = vmatprep.subr.mxu0 %v65
    %461 = vmatpush1.msra.mxu0 %v64
    %462 = vmatprep.subr.mxu0 %v68
    %463 = vmatpush1.msra.mxu0 %v67
    %464 = vmatprep.subr.mxu0 %v71
    %465 = vmatpush1.msra.mxu0 %v70
    %466 = vmatprep.subr.mxu0 %v74
    %467 = vmatpush1.msra.mxu0 %v73
    %468 = vmatprep.subr.mxu0 %v77
    %469 = vmatpush1.msra.mxu0 %v76
    %470 = vmatprep.subr.mxu0 %v80
    %471 = vmatpush1.msra.mxu0 %v79
    %472 = vmatprep.subr.mxu0 %v83
    %473 = vmatpush1.msra.mxu0 %v82
    %474 = vmatprep.subr.mxu0 %v86
    %475 = vmatpush1.msra.mxu0 %v85
    %476 = vmatprep.subr.mxu0 %v89
    %477 = vmatpush1.msra.mxu0 %v88
    %478 = vmatprep.subr.mxu0 0.0
    %479 = vmatpush1.msra.mxu0 0.0
    %480 = vmatprep.subr.mxu0 0.0
    %481 = vmatpush1.msra.mxu0 0.0
    %482 = vmatprep.subr.mxu0 0.0
    %483 = vmatpush1.msra.mxu0 0.0
    %484 = vmatprep.subr.mxu0 0.0
    %485 = vmatpush1.msra.mxu0 0.0
    %486 = vmatprep.subr.mxu0 0.0
    %487 = vmatpush1.msra.mxu0 0.0
    %488 = vmatprep.subr.mxu0 0.0
    %489 = vmatpush1.msra.mxu0 0.0
    %490 = vmatprep.subr.mxu0 0.0
    %491 = vmatpush1.msra.mxu0 0.0
    %492 = vmatprep.subr.mxu0 0.0
    %493 = vmatpush1.msra.mxu0 0.0
    %494 = vmatprep.subr.mxu0 0.0
    %495 = vmatpush1.msra.mxu0 0.0
    %496 = vmatprep.subr.mxu0 0.0
    %497 = vmatpush1.msra.mxu0 0.0
    %498 = vmatprep.subr.mxu0 0.0
    %499 = vmatpush1.msra.mxu0 0.0
    %500 = vmatprep.subr.mxu0 0.0
    %501 = vmatpush1.msra.mxu0 0.0
    %502 = vmatprep.subr.mxu0 0.0
    %503 = vmatpush1.msra.mxu0 0.0
    %504 = vmatprep.subr.mxu0 0.0
    %505 = vmatpush1.msra.mxu0 0.0
    %506 = vmatprep.subr.mxu0 0.0
    %507 = vmatpush1.msra.mxu0 0.0
    %508 = vmatprep.subr.mxu0 0.0
    %509 = vmatpush1.msra.mxu0 0.0
    %510 = vmatprep.mubr.f32.mxu0 0.0
    %511 = vmatmul.mubr.f32.gmra.mrb[0].mxu0 %v442
    %v512 = vpop.f32.mrb[0].mxu0
    %v513 = vadd.f32 %v96, %v512
    %v514 = vpop.f32.mrb[0].mxu0
    %v515 = vadd.f32 %v100, %v514
    %516 = vdwg.mxu0
    %517 = vmatprep.subr.mxu0 0.0
    %518 = vmatpush1.msra.mxu0 %v45
    %519 = vmatprep.subr.mxu0 0.0
    %520 = vmatpush1.msra.mxu0 %v48
    %521 = vmatprep.subr.mxu0 0.0
    %522 = vmatpush1.msra.mxu0 %v51
    %523 = vmatprep.subr.mxu0 0.0
    %524 = vmatpush1.msra.mxu0 %v54
    %525 = vmatprep.subr.mxu0 0.0
    %526 = vmatpush1.msra.mxu0 %v57
    %527 = vmatprep.subr.mxu0 0.0
    %528 = vmatpush1.msra.mxu0 %v60
    %529 = vmatprep.subr.mxu0 0.0
    %530 = vmatpush1.msra.mxu0 %v63
    %531 = vmatprep.subr.mxu0 0.0
    %532 = vmatpush1.msra.mxu0 %v66
    %533 = vmatprep.subr.mxu0 0.0
    %534 = vmatpush1.msra.mxu0 %v69
    %535 = vmatprep.subr.mxu0 0.0
    %536 = vmatpush1.msra.mxu0 %v72
    %537 = vmatprep.subr.mxu0 0.0
    %538 = vmatpush1.msra.mxu0 %v75
    %539 = vmatprep.subr.mxu0 0.0
    %540 = vmatpush1.msra.mxu0 %v78
    %541 = vmatprep.subr.mxu0 0.0
    %542 = vmatpush1.msra.mxu0 %v81
    %543 = vmatprep.subr.mxu0 0.0
    %544 = vmatpush1.msra.mxu0 %v84
    %545 = vmatprep.subr.mxu0 0.0
    %546 = vmatpush1.msra.mxu0 %v87
    %547 = vmatprep.subr.mxu0 0.0
    %548 = vmatpush1.msra.mxu0 %v90
    %549 = vmatprep.subr.mxu0 0.0
    %550 = vmatpush1.msra.mxu0 0.0
    %551 = vmatprep.subr.mxu0 0.0
    %552 = vmatpush1.msra.mxu0 0.0
    %553 = vmatprep.subr.mxu0 0.0
    %554 = vmatpush1.msra.mxu0 0.0
    %555 = vmatprep.subr.mxu0 0.0
    %556 = vmatpush1.msra.mxu0 0.0
    %557 = vmatprep.subr.mxu0 0.0
    %558 = vmatpush1.msra.mxu0 0.0
    %559 = vmatprep.subr.mxu0 0.0
    %560 = vmatpush1.msra.mxu0 0.0
    %561 = vmatprep.subr.mxu0 0.0
    %562 = vmatpush1.msra.mxu0 0.0
    %563 = vmatprep.subr.mxu0 0.0
    %564 = vmatpush1.msra.mxu0 0.0
    %565 = vmatprep.subr.mxu0 0.0
    %566 = vmatpush1.msra.mxu0 0.0
    %567 = vmatprep.subr.mxu0 0.0
    %568 = vmatpush1.msra.mxu0 0.0
    %569 = vmatprep.subr.mxu0 0.0
    %570 = vmatpush1.msra.mxu0 0.0
    %571 = vmatprep.subr.mxu0 0.0
    %572 = vmatpush1.msra.mxu0 0.0
    %573 = vmatprep.subr.mxu0 0.0
    %574 = vmatpush1.msra.mxu0 0.0
    %575 = vmatprep.subr.mxu0 0.0
    %576 = vmatpush1.msra.mxu0 0.0
    %577 = vmatprep.subr.mxu0 0.0
    %578 = vmatpush1.msra.mxu0 0.0
    %579 = vmatprep.subr.mxu0 0.0
    %580 = vmatpush1.msra.mxu0 0.0
    %581 = vmatprep.mubr.f32.mxu0 0.0
    %582 = vmatmul.mubr.f32.gmra.mrb[0].mxu0 %v442
    %v583 = vpop.f32.mrb[0].mxu0
    %v584 = vadd.f32 %v104, %v583
    %v585 = vpop.f32.mrb[0].mxu0
    %586 = vdwg.mxu0
    %v587 = vadd.f32 %v444, %v513
    %v588 = vxor.u32 %v587, 2147483648
    %v589 = vmul.f32 %v588, 1.442695
    %v590 = vpow.pop %v589
    %v591 = vadd.f32 %v590, 1.0
    %v592 = vrcp.pop %v591
    %v593 = vmul.f32 1.0, %v592
    %v595 = vrot.slane %v444, 4
    %v597 = vadd.f32 %v595, %v515
    %v598 = vxor.u32 %v597, 2147483648
    %v599 = vmul.f32 %v598, 1.442695
    %v600 = vpow.pop %v599
    %v601 = vadd.f32 %v600, 1.0
    %v602 = vrcp.pop %v601
    %v603 = vmul.f32 1.0, %v602
    %v604 = vmul.f32 %v593, %v584
    %v605 = vadd.f32 %v445, %v604
    %v606 = vtanh.pop %v605
    %v607 = vsub.f32 1.0, %v603
    %v608 = vmul.f32 %v607, %v606
    %v609 = vmul.f32 %v603, %v442
    %v610 = vadd.f32 %v608, %v609
    %s611 = scalar_lea.vmem [#allocation2], 36
    %v612 = vld [vmem:[%s611] sm:$0xff]
    %v613 = vld [vmem:[%s611 + $0x8] sm:$0xf]
    %614 = vmatprep.subr.mxu0 %v44
    %615 = vmatpush1.msra.mxu0 %v43
    %616 = vmatprep.subr.mxu0 %v47
    %617 = vmatpush1.msra.mxu0 %v46
    %618 = vmatprep.subr.mxu0 %v50
    %619 = vmatpush1.msra.mxu0 %v49
    %620 = vmatprep.subr.mxu0 %v53
    %621 = vmatpush1.msra.mxu0 %v52
    %622 = vmatprep.subr.mxu0 %v56
    %623 = vmatpush1.msra.mxu0 %v55
    %624 = vmatprep.subr.mxu0 %v59
    %625 = vmatpush1.msra.mxu0 %v58
    %626 = vmatprep.subr.mxu0 %v62
    %627 = vmatpush1.msra.mxu0 %v61
    %628 = vmatprep.subr.mxu0 %v65
    %629 = vmatpush1.msra.mxu0 %v64
    %630 = vmatprep.subr.mxu0 %v68
    %631 = vmatpush1.msra.mxu0 %v67
    %632 = vmatprep.subr.mxu0 %v71
    %633 = vmatpush1.msra.mxu0 %v70
    %634 = vmatprep.subr.mxu0 %v74
    %635 = vmatpush1.msra.mxu0 %v73
    %636 = vmatprep.subr.mxu0 %v77
    %637 = vmatpush1.msra.mxu0 %v76
    %638 = vmatprep.subr.mxu0 %v80
    %639 = vmatpush1.msra.mxu0 %v79
    %640 = vmatprep.subr.mxu0 %v83
    %641 = vmatpush1.msra.mxu0 %v82
    %642 = vmatprep.subr.mxu0 %v86
    %643 = vmatpush1.msra.mxu0 %v85
    %644 = vmatprep.subr.mxu0 %v89
    %645 = vmatpush1.msra.mxu0 %v88
    %646 = vmatprep.subr.mxu0 0.0
    %647 = vmatpush1.msra.mxu0 0.0
    %648 = vmatprep.subr.mxu0 0.0
    %649 = vmatpush1.msra.mxu0 0.0
    %650 = vmatprep.subr.mxu0 0.0
    %651 = vmatpush1.msra.mxu0 0.0
    %652 = vmatprep.subr.mxu0 0.0
    %653 = vmatpush1.msra.mxu0 0.0
    %654 = vmatprep.subr.mxu0 0.0
    %655 = vmatpush1.msra.mxu0 0.0
    %656 = vmatprep.subr.mxu0 0.0
    %657 = vmatpush1.msra.mxu0 0.0
    %658 = vmatprep.subr.mxu0 0.0
    %659 = vmatpush1.msra.mxu0 0.0
    %660 = vmatprep.subr.mxu0 0.0
    %661 = vmatpush1.msra.mxu0 0.0
    %662 = vmatprep.subr.mxu0 0.0
    %663 = vmatpush1.msra.mxu0 0.0
    %664 = vmatprep.subr.mxu0 0.0
    %665 = vmatpush1.msra.mxu0 0.0
    %666 = vmatprep.subr.mxu0 0.0
    %667 = vmatpush1.msra.mxu0 0.0
    %668 = vmatprep.subr.mxu0 0.0
    %669 = vmatpush1.msra.mxu0 0.0
    %670 = vmatprep.subr.mxu0 0.0
    %671 = vmatpush1.msra.mxu0 0.0
    %672 = vmatprep.subr.mxu0 0.0
    %673 = vmatpush1.msra.mxu0 0.0
    %674 = vmatprep.subr.mxu0 0.0
    %675 = vmatpush1.msra.mxu0 0.0
    %676 = vmatprep.subr.mxu0 0.0
    %677 = vmatpush1.msra.mxu0 0.0
    %678 = vmatprep.mubr.f32.mxu0 0.0
    %679 = vmatmul.mubr.f32.gmra.mrb[0].mxu0 %v610
    %v680 = vpop.f32.mrb[0].mxu0
    %v681 = vadd.f32 %v96, %v680
    %v682 = vpop.f32.mrb[0].mxu0
    %v683 = vadd.f32 %v100, %v682
    %684 = vdwg.mxu0
    %685 = vmatprep.subr.mxu0 0.0
    %686 = vmatpush1.msra.mxu0 %v45
    %687 = vmatprep.subr.mxu0 0.0
    %688 = vmatpush1.msra.mxu0 %v48
    %689 = vmatprep.subr.mxu0 0.0
    %690 = vmatpush1.msra.mxu0 %v51
    %691 = vmatprep.subr.mxu0 0.0
    %692 = vmatpush1.msra.mxu0 %v54
    %693 = vmatprep.subr.mxu0 0.0
    %694 = vmatpush1.msra.mxu0 %v57
    %695 = vmatprep.subr.mxu0 0.0
    %696 = vmatpush1.msra.mxu0 %v60
    %697 = vmatprep.subr.mxu0 0.0
    %698 = vmatpush1.msra.mxu0 %v63
    %699 = vmatprep.subr.mxu0 0.0
    %700 = vmatpush1.msra.mxu0 %v66
    %701 = vmatprep.subr.mxu0 0.0
    %702 = vmatpush1.msra.mxu0 %v69
    %703 = vmatprep.subr.mxu0 0.0
    %704 = vmatpush1.msra.mxu0 %v72
    %705 = vmatprep.subr.mxu0 0.0
    %706 = vmatpush1.msra.mxu0 %v75
    %707 = vmatprep.subr.mxu0 0.0
    %708 = vmatpush1.msra.mxu0 %v78
    %709 = vmatprep.subr.mxu0 0.0
    %710 = vmatpush1.msra.mxu0 %v81
    %711 = vmatprep.subr.mxu0 0.0
    %712 = vmatpush1.msra.mxu0 %v84
    %713 = vmatprep.subr.mxu0 0.0
    %714 = vmatpush1.msra.mxu0 %v87
    %715 = vmatprep.subr.mxu0 0.0
    %716 = vmatpush1.msra.mxu0 %v90
    %717 = vmatprep.subr.mxu0 0.0
    %718 = vmatpush1.msra.mxu0 0.0
    %719 = vmatprep.subr.mxu0 0.0
    %720 = vmatpush1.msra.mxu0 0.0
    %721 = vmatprep.subr.mxu0 0.0
    %722 = vmatpush1.msra.mxu0 0.0
    %723 = vmatprep.subr.mxu0 0.0
    %724 = vmatpush1.msra.mxu0 0.0
    %725 = vmatprep.subr.mxu0 0.0
    %726 = vmatpush1.msra.mxu0 0.0
    %727 = vmatprep.subr.mxu0 0.0
    %728 = vmatpush1.msra.mxu0 0.0
    %729 = vmatprep.subr.mxu0 0.0
    %730 = vmatpush1.msra.mxu0 0.0
    %731 = vmatprep.subr.mxu0 0.0
    %732 = vmatpush1.msra.mxu0 0.0
    %733 = vmatprep.subr.mxu0 0.0
    %734 = vmatpush1.msra.mxu0 0.0
    %735 = vmatprep.subr.mxu0 0.0
    %736 = vmatpush1.msra.mxu0 0.0
    %737 = vmatprep.subr.mxu0 0.0
    %738 = vmatpush1.msra.mxu0 0.0
    %739 = vmatprep.subr.mxu0 0.0
    %740 = vmatpush1.msra.mxu0 0.0
    %741 = vmatprep.subr.mxu0 0.0
    %742 = vmatpush1.msra.mxu0 0.0
    %743 = vmatprep.subr.mxu0 0.0
    %744 = vmatpush1.msra.mxu0 0.0
    %745 = vmatprep.subr.mxu0 0.0
    %746 = vmatpush1.msra.mxu0 0.0
    %747 = vmatprep.subr.mxu0 0.0
    %748 = vmatpush1.msra.mxu0 0.0
    %749 = vmatprep.mubr.f32.mxu0 0.0
    %750 = vmatmul.mubr.f32.gmra.mrb[0].mxu0 %v610
    %v751 = vpop.f32.mrb[0].mxu0
    %v752 = vadd.f32 %v104, %v751
    %v753 = vpop.f32.mrb[0].mxu0
    %754 = vdwg.mxu0
    %v755 = vadd.f32 %v612, %v681
    %v756 = vxor.u32 %v755, 2147483648
    %v757 = vmul.f32 %v756, 1.442695
    %v758 = vpow.pop %v757
    %v759 = vadd.f32 %v758, 1.0
    %v760 = vrcp.pop %v759
    %v761 = vmul.f32 1.0, %v760
    %v763 = vrot.slane %v612, 4
    %v765 = vadd.f32 %v763, %v683
    %v766 = vxor.u32 %v765, 2147483648
    %v767 = vmul.f32 %v766, 1.442695
    %v768 = vpow.pop %v767
    %v769 = vadd.f32 %v768, 1.0
    %v770 = vrcp.pop %v769
    %v771 = vmul.f32 1.0, %v770
    %v772 = vmul.f32 %v761, %v752
    %v773 = vadd.f32 %v613, %v772
    %v774 = vtanh.pop %v773
    %v775 = vsub.f32 1.0, %v771
    %v776 = vmul.f32 %v775, %v774
    %v777 = vmul.f32 %v771, %v610
    %v778 = vadd.f32 %v776, %v777
    %s779 = scalar_lea.vmem [#allocation2], 48
    %v780 = vld [vmem:[%s779] sm:$0xff]
    %v781 = vld [vmem:[%s779 + $0x8] sm:$0xf]
    %782 = vmatprep.subr.mxu0 %v44
    %783 = vmatpush1.msra.mxu0 %v43
    %784 = vmatprep.subr.mxu0 %v47
    %785 = vmatpush1.msra.mxu0 %v46
    %786 = vmatprep.subr.mxu0 %v50
    %787 = vmatpush1.msra.mxu0 %v49
    %788 = vmatprep.subr.mxu0 %v53
    %789 = vmatpush1.msra.mxu0 %v52
    %790 = vmatprep.subr.mxu0 %v56
    %791 = vmatpush1.msra.mxu0 %v55
    %792 = vmatprep.subr.mxu0 %v59
    %793 = vmatpush1.msra.mxu0 %v58
    %794 = vmatprep.subr.mxu0 %v62
    %795 = vmatpush1.msra.mxu0 %v61
    %796 = vmatprep.subr.mxu0 %v65
    %797 = vmatpush1.msra.mxu0 %v64
    %798 = vmatprep.subr.mxu0 %v68
    %799 = vmatpush1.msra.mxu0 %v67
    %800 = vmatprep.subr.mxu0 %v71
    %801 = vmatpush1.msra.mxu0 %v70
    %802 = vmatprep.subr.mxu0 %v74
    %803 = vmatpush1.msra.mxu0 %v73
    %804 = vmatprep.subr.mxu0 %v77
    %805 = vmatpush1.msra.mxu0 %v76
    %806 = vmatprep.subr.mxu0 %v80
    %807 = vmatpush1.msra.mxu0 %v79
    %808 = vmatprep.subr.mxu0 %v83
    %809 = vmatpush1.msra.mxu0 %v82
    %810 = vmatprep.subr.mxu0 %v86
    %811 = vmatpush1.msra.mxu0 %v85
    %812 = vmatprep.subr.mxu0 %v89
    %813 = vmatpush1.msra.mxu0 %v88
    %814 = vmatprep.subr.mxu0 0.0
    %815 = vmatpush1.msra.mxu0 0.0
    %816 = vmatprep.subr.mxu0 0.0
    %817 = vmatpush1.msra.mxu0 0.0
    %818 = vmatprep.subr.mxu0 0.0
    %819 = vmatpush1.msra.mxu0 0.0
    %820 = vmatprep.subr.mxu0 0.0
    %821 = vmatpush1.msra.mxu0 0.0
    %822 = vmatprep.subr.mxu0 0.0
    %823 = vmatpush1.msra.mxu0 0.0
    %824 = vmatprep.subr.mxu0 0.0
    %825 = vmatpush1.msra.mxu0 0.0
    %826 = vmatprep.subr.mxu0 0.0
    %827 = vmatpush1.msra.mxu0 0.0
    %828 = vmatprep.subr.mxu0 0.0
    %829 = vmatpush1.msra.mxu0 0.0
    %830 = vmatprep.subr.mxu0 0.0
    %831 = vmatpush1.msra.mxu0 0.0
    %832 = vmatprep.subr.mxu0 0.0
    %833 = vmatpush1.msra.mxu0 0.0
    %834 = vmatprep.subr.mxu0 0.0
    %835 = vmatpush1.msra.mxu0 0.0
    %836 = vmatprep.subr.mxu0 0.0
    %837 = vmatpush1.msra.mxu0 0.0
    %838 = vmatprep.subr.mxu0 0.0
    %839 = vmatpush1.msra.mxu0 0.0
    %840 = vmatprep.subr.mxu0 0.0
    %841 = vmatpush1.msra.mxu0 0.0
    %842 = vmatprep.subr.mxu0 0.0
    %843 = vmatpush1.msra.mxu0 0.0
    %844 = vmatprep.subr.mxu0 0.0
    %845 = vmatpush1.msra.mxu0 0.0
    %846 = vmatprep.mubr.f32.mxu0 0.0
    %847 = vmatmul.mubr.f32.gmra.mrb[0].mxu0 %v778
    %v848 = vpop.f32.mrb[0].mxu0
    %v849 = vadd.f32 %v96, %v848
    %v850 = vpop.f32.mrb[0].mxu0
    %v851 = vadd.f32 %v100, %v850
    %852 = vdwg.mxu0
    %853 = vmatprep.subr.mxu0 0.0
    %854 = vmatpush1.msra.mxu0 %v45
    %855 = vmatprep.subr.mxu0 0.0
    %856 = vmatpush1.msra.mxu0 %v48
    %857 = vmatprep.subr.mxu0 0.0
    %858 = vmatpush1.msra.mxu0 %v51
    %859 = vmatprep.subr.mxu0 0.0
    %860 = vmatpush1.msra.mxu0 %v54
    %861 = vmatprep.subr.mxu0 0.0
    %862 = vmatpush1.msra.mxu0 %v57
    %863 = vmatprep.subr.mxu0 0.0
    %864 = vmatpush1.msra.mxu0 %v60
    %865 = vmatprep.subr.mxu0 0.0
    %866 = vmatpush1.msra.mxu0 %v63
    %867 = vmatprep.subr.mxu0 0.0
    %868 = vmatpush1.msra.mxu0 %v66
    %869 = vmatprep.subr.mxu0 0.0
    %870 = vmatpush1.msra.mxu0 %v69
    %871 = vmatprep.subr.mxu0 0.0
    %872 = vmatpush1.msra.mxu0 %v72
    %873 = vmatprep.subr.mxu0 0.0
    %874 = vmatpush1.msra.mxu0 %v75
    %875 = vmatprep.subr.mxu0 0.0
    %876 = vmatpush1.msra.mxu0 %v78
    %877 = vmatprep.subr.mxu0 0.0
    %878 = vmatpush1.msra.mxu0 %v81
    %879 = vmatprep.subr.mxu0 0.0
    %880 = vmatpush1.msra.mxu0 %v84
    %881 = vmatprep.subr.mxu0 0.0
    %882 = vmatpush1.msra.mxu0 %v87
    %883 = vmatprep.subr.mxu0 0.0
    %884 = vmatpush1.msra.mxu0 %v90
    %885 = vmatprep.subr.mxu0 0.0
    %886 = vmatpush1.msra.mxu0 0.0
    %887 = vmatprep.subr.mxu0 0.0
    %888 = vmatpush1.msra.mxu0 0.0
    %889 = vmatprep.subr.mxu0 0.0
    %890 = vmatpush1.msra.mxu0 0.0
    %891 = vmatprep.subr.mxu0 0.0
    %892 = vmatpush1.msra.mxu0 0.0
    %893 = vmatprep.subr.mxu0 0.0
    %894 = vmatpush1.msra.mxu0 0.0
    %895 = vmatprep.subr.mxu0 0.0
    %896 = vmatpush1.msra.mxu0 0.0
    %897 = vmatprep.subr.mxu0 0.0
    %898 = vmatpush1.msra.mxu0 0.0
    %899 = vmatprep.subr.mxu0 0.0
    %900 = vmatpush1.msra.mxu0 0.0
    %901 = vmatprep.subr.mxu0 0.0
    %902 = vmatpush1.msra.mxu0 0.0
    %903 = vmatprep.subr.mxu0 0.0
    %904 = vmatpush1.msra.mxu0 0.0
    %905 = vmatprep.subr.mxu0 0.0
    %906 = vmatpush1.msra.mxu0 0.0
    %907 = vmatprep.subr.mxu0 0.0
    %908 = vmatpush1.msra.mxu0 0.0
    %909 = vmatprep.subr.mxu0 0.0
    %910 = vmatpush1.msra.mxu0 0.0
    %911 = vmatprep.subr.mxu0 0.0
    %912 = vmatpush1.msra.mxu0 0.0
    %913 = vmatprep.subr.mxu0 0.0
    %914 = vmatpush1.msra.mxu0 0.0
    %915 = vmatprep.subr.mxu0 0.0
    %916 = vmatpush1.msra.mxu0 0.0
    %917 = vmatprep.mubr.f32.mxu0 0.0
    %918 = vmatmul.mubr.f32.gmra.mrb[0].mxu0 %v778
    %v919 = vpop.f32.mrb[0].mxu0
    %v920 = vadd.f32 %v104, %v919
    %v921 = vpop.f32.mrb[0].mxu0
    %922 = vdwg.mxu0
    %v923 = vadd.f32 %v780, %v849
    %v924 = vxor.u32 %v923, 2147483648
    %v925 = vmul.f32 %v924, 1.442695
    %v926 = vpow.pop %v925
    %v927 = vadd.f32 %v926, 1.0
    %v928 = vrcp.pop %v927
    %v929 = vmul.f32 1.0, %v928
    %v931 = vrot.slane %v780, 4
    %v933 = vadd.f32 %v931, %v851
    %v934 = vxor.u32 %v933, 2147483648
    %v935 = vmul.f32 %v934, 1.442695
    %v936 = vpow.pop %v935
    %v937 = vadd.f32 %v936, 1.0
    %v938 = vrcp.pop %v937
    %v939 = vmul.f32 1.0, %v938
    %v940 = vmul.f32 %v929, %v920
    %v941 = vadd.f32 %v781, %v940
    %v942 = vtanh.pop %v941
    %v943 = vsub.f32 1.0, %v939
    %v944 = vmul.f32 %v943, %v942
    %v945 = vmul.f32 %v939, %v778
    %v946 = vadd.f32 %v944, %v945
    %s947 = scalar_lea.vmem [#allocation2], 60
    %v948 = vld [vmem:[%s947] sm:$0xff]
    %v949 = vld [vmem:[%s947 + $0x8] sm:$0xf]
    %950 = vmatprep.subr.mxu0 %v44
    %951 = vmatpush1.msra.mxu0 %v43
    %952 = vmatprep.subr.mxu0 %v47
    %953 = vmatpush1.msra.mxu0 %v46
    %954 = vmatprep.subr.mxu0 %v50
    %955 = vmatpush1.msra.mxu0 %v49
    %956 = vmatprep.subr.mxu0 %v53
    %957 = vmatpush1.msra.mxu0 %v52
    %958 = vmatprep.subr.mxu0 %v56
    %959 = vmatpush1.msra.mxu0 %v55
    %960 = vmatprep.subr.mxu0 %v59
    %961 = vmatpush1.msra.mxu0 %v58
    %962 = vmatprep.subr.mxu0 %v62
    %963 = vmatpush1.msra.mxu0 %v61
    %964 = vmatprep.subr.mxu0 %v65
    %965 = vmatpush1.msra.mxu0 %v64
    %966 = vmatprep.subr.mxu0 %v68
    %967 = vmatpush1.msra.mxu0 %v67
    %968 = vmatprep.subr.mxu0 %v71
    %969 = vmatpush1.msra.mxu0 %v70
    %970 = vmatprep.subr.mxu0 %v74
    %971 = vmatpush1.msra.mxu0 %v73
    %972 = vmatprep.subr.mxu0 %v77
    %973 = vmatpush1.msra.mxu0 %v76
    %974 = vmatprep.subr.mxu0 %v80
    %975 = vmatpush1.msra.mxu0 %v79
    %976 = vmatprep.subr.mxu0 %v83
    %977 = vmatpush1.msra.mxu0 %v82
    %978 = vmatprep.subr.mxu0 %v86
    %979 = vmatpush1.msra.mxu0 %v85
    %980 = vmatprep.subr.mxu0 %v89
    %981 = vmatpush1.msra.mxu0 %v88
    %982 = vmatprep.subr.mxu0 0.0
    %983 = vmatpush1.msra.mxu0 0.0
    %984 = vmatprep.subr.mxu0 0.0
    %985 = vmatpush1.msra.mxu0 0.0
    %986 = vmatprep.subr.mxu0 0.0
    %987 = vmatpush1.msra.mxu0 0.0
    %988 = vmatprep.subr.mxu0 0.0
    %989 = vmatpush1.msra.mxu0 0.0
    %990 = vmatprep.subr.mxu0 0.0
    %991 = vmatpush1.msra.mxu0 0.0
    %992 = vmatprep.subr.mxu0 0.0
    %993 = vmatpush1.msra.mxu0 0.0
    %994 = vmatprep.subr.mxu0 0.0
    %995 = vmatpush1.msra.mxu0 0.0
    %996 = vmatprep.subr.mxu0 0.0
    %997 = vmatpush1.msra.mxu0 0.0
    %998 = vmatprep.subr.mxu0 0.0
    %999 = vmatpush1.msra.mxu0 0.0
    %1000 = vmatprep.subr.mxu0 0.0
    %1001 = vmatpush1.msra.mxu0 0.0
    %1002 = vmatprep.subr.mxu0 0.0
    %1003 = vmatpush1.msra.mxu0 0.0
    %1004 = vmatprep.subr.mxu0 0.0
    %1005 = vmatpush1.msra.mxu0 0.0
    %1006 = vmatprep.subr.mxu0 0.0
    %1007 = vmatpush1.msra.mxu0 0.0
    %1008 = vmatprep.subr.mxu0 0.0
    %1009 = vmatpush1.msra.mxu0 0.0
    %1010 = vmatprep.subr.mxu0 0.0
    %1011 = vmatpush1.msra.mxu0 0.0
    %1012 = vmatprep.subr.mxu0 0.0
    %1013 = vmatpush1.msra.mxu0 0.0
    %1014 = vmatprep.mubr.f32.mxu0 0.0
    %1015 = vmatmul.mubr.f32.gmra.mrb[0].mxu0 %v946
    %v1016 = vpop.f32.mrb[0].mxu0
    %v1017 = vadd.f32 %v96, %v1016
    %v1018 = vpop.f32.mrb[0].mxu0
    %v1019 = vadd.f32 %v100, %v1018
    %1020 = vdwg.mxu0
    %1021 = vmatprep.subr.mxu0 0.0
    %1022 = vmatpush1.msra.mxu0 %v45
    %1023 = vmatprep.subr.mxu0 0.0
    %1024 = vmatpush1.msra.mxu0 %v48
    %1025 = vmatprep.subr.mxu0 0.0
    %1026 = vmatpush1.msra.mxu0 %v51
    %1027 = vmatprep.subr.mxu0 0.0
    %1028 = vmatpush1.msra.mxu0 %v54
    %1029 = vmatprep.subr.mxu0 0.0
    %1030 = vmatpush1.msra.mxu0 %v57
    %1031 = vmatprep.subr.mxu0 0.0
    %1032 = vmatpush1.msra.mxu0 %v60
    %1033 = vmatprep.subr.mxu0 0.0
    %1034 = vmatpush1.msra.mxu0 %v63
    %1035 = vmatprep.subr.mxu0 0.0
    %1036 = vmatpush1.msra.mxu0 %v66
    %1037 = vmatprep.subr.mxu0 0.0
    %1038 = vmatpush1.msra.mxu0 %v69
    %1039 = vmatprep.subr.mxu0 0.0
    %1040 = vmatpush1.msra.mxu0 %v72
    %1041 = vmatprep.subr.mxu0 0.0
    %1042 = vmatpush1.msra.mxu0 %v75
    %1043 = vmatprep.subr.mxu0 0.0
    %1044 = vmatpush1.msra.mxu0 %v78
    %1045 = vmatprep.subr.mxu0 0.0
    %1046 = vmatpush1.msra.mxu0 %v81
    %1047 = vmatprep.subr.mxu0 0.0
    %1048 = vmatpush1.msra.mxu0 %v84
    %1049 = vmatprep.subr.mxu0 0.0
    %1050 = vmatpush1.msra.mxu0 %v87
    %1051 = vmatprep.subr.mxu0 0.0
    %1052 = vmatpush1.msra.mxu0 %v90
    %1053 = vmatprep.subr.mxu0 0.0
    %1054 = vmatpush1.msra.mxu0 0.0
    %1055 = vmatprep.subr.mxu0 0.0
    %1056 = vmatpush1.msra.mxu0 0.0
    %1057 = vmatprep.subr.mxu0 0.0
    %1058 = vmatpush1.msra.mxu0 0.0
    %1059 = vmatprep.subr.mxu0 0.0
    %1060 = vmatpush1.msra.mxu0 0.0
    %1061 = vmatprep.subr.mxu0 0.0
    %1062 = vmatpush1.msra.mxu0 0.0
    %1063 = vmatprep.subr.mxu0 0.0
    %1064 = vmatpush1.msra.mxu0 0.0
    %1065 = vmatprep.subr.mxu0 0.0
    %1066 = vmatpush1.msra.mxu0 0.0
    %1067 = vmatprep.subr.mxu0 0.0
    %1068 = vmatpush1.msra.mxu0 0.0
    %1069 = vmatprep.subr.mxu0 0.0
    %1070 = vmatpush1.msra.mxu0 0.0
    %1071 = vmatprep.subr.mxu0 0.0
    %1072 = vmatpush1.msra.mxu0 0.0
    %1073 = vmatprep.subr.mxu0 0.0
    %1074 = vmatpush1.msra.mxu0 0.0
    %1075 = vmatprep.subr.mxu0 0.0
    %1076 = vmatpush1.msra.mxu0 0.0
    %1077 = vmatprep.subr.mxu0 0.0
    %1078 = vmatpush1.msra.mxu0 0.0
    %1079 = vmatprep.subr.mxu0 0.0
    %1080 = vmatpush1.msra.mxu0 0.0
    %1081 = vmatprep.subr.mxu0 0.0
    %1082 = vmatpush1.msra.mxu0 0.0
    %1083 = vmatprep.subr.mxu0 0.0
    %1084 = vmatpush1.msra.mxu0 0.0
    %1085 = vmatprep.mubr.f32.mxu0 0.0
    %1086 = vmatmul.mubr.f32.gmra.mrb[0].mxu0 %v946
    %v1087 = vpop.f32.mrb[0].mxu0
    %v1088 = vadd.f32 %v104, %v1087
    %v1089 = vpop.f32.mrb[0].mxu0
    %1090 = vdwg.mxu0
    %v1091 = vadd.f32 %v948, %v1017
    %v1092 = vxor.u32 %v1091, 2147483648
    %v1093 = vmul.f32 %v1092, 1.442695
    %v1094 = vpow.pop %v1093
    %v1095 = vadd.f32 %v1094, 1.0
    %v1096 = vrcp.pop %v1095
    %v1097 = vmul.f32 1.0, %v1096
    %v1099 = vrot.slane %v948, 4
    %v1101 = vadd.f32 %v1099, %v1019
    %v1102 = vxor.u32 %v1101, 2147483648
    %v1103 = vmul.f32 %v1102, 1.442695
    %v1104 = vpow.pop %v1103
    %v1105 = vadd.f32 %v1104, 1.0
    %v1106 = vrcp.pop %v1105
    %v1107 = vmul.f32 1.0, %v1106
    %v1108 = vmul.f32 %v1097, %v1088
    %v1109 = vadd.f32 %v949, %v1108
    %v1110 = vtanh.pop %v1109
    %v1111 = vsub.f32 1.0, %v1107
    %v1112 = vmul.f32 %v1111, %v1110
    %v1113 = vmul.f32 %v1107, %v946
    %v1114 = vadd.f32 %v1112, %v1113
    %s1115 = scalar_lea.vmem [#allocation2], 72
    %v1116 = vld [vmem:[%s1115] sm:$0xff]
    %v1117 = vld [vmem:[%s1115 + $0x8] sm:$0xf]
    %1118 = vmatprep.subr.mxu0 %v44
    %1119 = vmatpush1.msra.mxu0 %v43
    %1120 = vmatprep.subr.mxu0 %v47
    %1121 = vmatpush1.msra.mxu0 %v46
    %1122 = vmatprep.subr.mxu0 %v50
    %1123 = vmatpush1.msra.mxu0 %v49
    %1124 = vmatprep.subr.mxu0 %v53
    %1125 = vmatpush1.msra.mxu0 %v52
    %1126 = vmatprep.subr.mxu0 %v56
    %1127 = vmatpush1.msra.mxu0 %v55
    %1128 = vmatprep.subr.mxu0 %v59
    %1129 = vmatpush1.msra.mxu0 %v58
    %1130 = vmatprep.subr.mxu0 %v62
    %1131 = vmatpush1.msra.mxu0 %v61
    %1132 = vmatprep.subr.mxu0 %v65
    %1133 = vmatpush1.msra.mxu0 %v64
    %1134 = vmatprep.subr.mxu0 %v68
    %1135 = vmatpush1.msra.mxu0 %v67
    %1136 = vmatprep.subr.mxu0 %v71
    %1137 = vmatpush1.msra.mxu0 %v70
    %1138 = vmatprep.subr.mxu0 %v74
    %1139 = vmatpush1.msra.mxu0 %v73
    %1140 = vmatprep.subr.mxu0 %v77
    %1141 = vmatpush1.msra.mxu0 %v76
    %1142 = vmatprep.subr.mxu0 %v80
    %1143 = vmatpush1.msra.mxu0 %v79
    %1144 = vmatprep.subr.mxu0 %v83
    %1145 = vmatpush1.msra.mxu0 %v82
    %1146 = vmatprep.subr.mxu0 %v86
    %1147 = vmatpush1.msra.mxu0 %v85
    %1148 = vmatprep.subr.mxu0 %v89
    %1149 = vmatpush1.msra.mxu0 %v88
    %1150 = vmatprep.subr.mxu0 0.0
    %1151 = vmatpush1.msra.mxu0 0.0
    %1152 = vmatprep.subr.mxu0 0.0
    %1153 = vmatpush1.msra.mxu0 0.0
    %1154 = vmatprep.subr.mxu0 0.0
    %1155 = vmatpush1.msra.mxu0 0.0
    %1156 = vmatprep.subr.mxu0 0.0
    %1157 = vmatpush1.msra.mxu0 0.0
    %1158 = vmatprep.subr.mxu0 0.0
    %1159 = vmatpush1.msra.mxu0 0.0
    %1160 = vmatprep.subr.mxu0 0.0
    %1161 = vmatpush1.msra.mxu0 0.0
    %1162 = vmatprep.subr.mxu0 0.0
    %1163 = vmatpush1.msra.mxu0 0.0
    %1164 = vmatprep.subr.mxu0 0.0
    %1165 = vmatpush1.msra.mxu0 0.0
    %1166 = vmatprep.subr.mxu0 0.0
    %1167 = vmatpush1.msra.mxu0 0.0
    %1168 = vmatprep.subr.mxu0 0.0
    %1169 = vmatpush1.msra.mxu0 0.0
    %1170 = vmatprep.subr.mxu0 0.0
    %1171 = vmatpush1.msra.mxu0 0.0
    %1172 = vmatprep.subr.mxu0 0.0
    %1173 = vmatpush1.msra.mxu0 0.0
    %1174 = vmatprep.subr.mxu0 0.0
    %1175 = vmatpush1.msra.mxu0 0.0
    %1176 = vmatprep.subr.mxu0 0.0
    %1177 = vmatpush1.msra.mxu0 0.0
    %1178 = vmatprep.subr.mxu0 0.0
    %1179 = vmatpush1.msra.mxu0 0.0
    %1180 = vmatprep.subr.mxu0 0.0
    %1181 = vmatpush1.msra.mxu0 0.0
    %1182 = vmatprep.mubr.f32.mxu0 0.0
    %1183 = vmatmul.mubr.f32.gmra.mrb[0].mxu0 %v1114
    %v1184 = vpop.f32.mrb[0].mxu0
    %v1185 = vadd.f32 %v96, %v1184
    %v1186 = vpop.f32.mrb[0].mxu0
    %v1187 = vadd.f32 %v100, %v1186
    %1188 = vdwg.mxu0
    %1189 = vmatprep.subr.mxu0 0.0
    %1190 = vmatpush1.msra.mxu0 %v45
    %1191 = vmatprep.subr.mxu0 0.0
    %1192 = vmatpush1.msra.mxu0 %v48
    %1193 = vmatprep.subr.mxu0 0.0
    %1194 = vmatpush1.msra.mxu0 %v51
    %1195 = vmatprep.subr.mxu0 0.0
    %1196 = vmatpush1.msra.mxu0 %v54
    %1197 = vmatprep.subr.mxu0 0.0
    %1198 = vmatpush1.msra.mxu0 %v57
    %1199 = vmatprep.subr.mxu0 0.0
    %1200 = vmatpush1.msra.mxu0 %v60
    %1201 = vmatprep.subr.mxu0 0.0
    %1202 = vmatpush1.msra.mxu0 %v63
    %1203 = vmatprep.subr.mxu0 0.0
    %1204 = vmatpush1.msra.mxu0 %v66
    %1205 = vmatprep.subr.mxu0 0.0
    %1206 = vmatpush1.msra.mxu0 %v69
    %1207 = vmatprep.subr.mxu0 0.0
    %1208 = vmatpush1.msra.mxu0 %v72
    %1209 = vmatprep.subr.mxu0 0.0
    %1210 = vmatpush1.msra.mxu0 %v75
    %1211 = vmatprep.subr.mxu0 0.0
    %1212 = vmatpush1.msra.mxu0 %v78
    %1213 = vmatprep.subr.mxu0 0.0
    %1214 = vmatpush1.msra.mxu0 %v81
    %1215 = vmatprep.subr.mxu0 0.0
    %1216 = vmatpush1.msra.mxu0 %v84
    %1217 = vmatprep.subr.mxu0 0.0
    %1218 = vmatpush1.msra.mxu0 %v87
    %1219 = vmatprep.subr.mxu0 0.0
    %1220 = vmatpush1.msra.mxu0 %v90
    %1221 = vmatprep.subr.mxu0 0.0
    %1222 = vmatpush1.msra.mxu0 0.0
    %1223 = vmatprep.subr.mxu0 0.0
    %1224 = vmatpush1.msra.mxu0 0.0
    %1225 = vmatprep.subr.mxu0 0.0
    %1226 = vmatpush1.msra.mxu0 0.0
    %1227 = vmatprep.subr.mxu0 0.0
    %1228 = vmatpush1.msra.mxu0 0.0
    %1229 = vmatprep.subr.mxu0 0.0
    %1230 = vmatpush1.msra.mxu0 0.0
    %1231 = vmatprep.subr.mxu0 0.0
    %1232 = vmatpush1.msra.mxu0 0.0
    %1233 = vmatprep.subr.mxu0 0.0
    %1234 = vmatpush1.msra.mxu0 0.0
    %1235 = vmatprep.subr.mxu0 0.0
    %1236 = vmatpush1.msra.mxu0 0.0
    %1237 = vmatprep.subr.mxu0 0.0
    %1238 = vmatpush1.msra.mxu0 0.0
    %1239 = vmatprep.subr.mxu0 0.0
    %1240 = vmatpush1.msra.mxu0 0.0
    %1241 = vmatprep.subr.mxu0 0.0
    %1242 = vmatpush1.msra.mxu0 0.0
    %1243 = vmatprep.subr.mxu0 0.0
    %1244 = vmatpush1.msra.mxu0 0.0
    %1245 = vmatprep.subr.mxu0 0.0
    %1246 = vmatpush1.msra.mxu0 0.0
    %1247 = vmatprep.subr.mxu0 0.0
    %1248 = vmatpush1.msra.mxu0 0.0
    %1249 = vmatprep.subr.mxu0 0.0
    %1250 = vmatpush1.msra.mxu0 0.0
    %1251 = vmatprep.subr.mxu0 0.0
    %1252 = vmatpush1.msra.mxu0 0.0
    %1253 = vmatprep.mubr.f32.mxu0 0.0
    %1254 = vmatmul.mubr.f32.gmra.mrb[0].mxu0 %v1114
    %v1255 = vpop.f32.mrb[0].mxu0
    %v1256 = vadd.f32 %v104, %v1255
    %v1257 = vpop.f32.mrb[0].mxu0
    %1258 = vdwg.mxu0
    %v1259 = vadd.f32 %v1116, %v1185
    %v1260 = vxor.u32 %v1259, 2147483648
    %v1261 = vmul.f32 %v1260, 1.442695
    %v1262 = vpow.pop %v1261
    %v1263 = vadd.f32 %v1262, 1.0
    %v1264 = vrcp.pop %v1263
    %v1265 = vmul.f32 1.0, %v1264
    %v1267 = vrot.slane %v1116, 4
    %v1269 = vadd.f32 %v1267, %v1187
    %v1270 = vxor.u32 %v1269, 2147483648
    %v1271 = vmul.f32 %v1270, 1.442695
    %v1272 = vpow.pop %v1271
    %v1273 = vadd.f32 %v1272, 1.0
    %v1274 = vrcp.pop %v1273
    %v1275 = vmul.f32 1.0, %v1274
    %v1276 = vmul.f32 %v1265, %v1256
    %v1277 = vadd.f32 %v1117, %v1276
    %v1278 = vtanh.pop %v1277
    %v1279 = vsub.f32 1.0, %v1275
    %v1280 = vmul.f32 %v1279, %v1278
    %v1281 = vmul.f32 %v1275, %v1114
    %v1282 = vadd.f32 %v1280, %v1281
    %s1283 = scalar_lea.vmem [#allocation2], 84
    %v1284 = vld [vmem:[%s1283] sm:$0xff]
    %v1285 = vld [vmem:[%s1283 + $0x8] sm:$0xf]
    %1286 = vmatprep.subr.mxu0 %v44
    %1287 = vmatpush1.msra.mxu0 %v43
    %1288 = vmatprep.subr.mxu0 %v47
    %1289 = vmatpush1.msra.mxu0 %v46
    %1290 = vmatprep.subr.mxu0 %v50
    %1291 = vmatpush1.msra.mxu0 %v49
    %1292 = vmatprep.subr.mxu0 %v53
    %1293 = vmatpush1.msra.mxu0 %v52
    %1294 = vmatprep.subr.mxu0 %v56
    %1295 = vmatpush1.msra.mxu0 %v55
    %1296 = vmatprep.subr.mxu0 %v59
    %1297 = vmatpush1.msra.mxu0 %v58
    %1298 = vmatprep.subr.mxu0 %v62
    %1299 = vmatpush1.msra.mxu0 %v61
    %1300 = vmatprep.subr.mxu0 %v65
    %1301 = vmatpush1.msra.mxu0 %v64
    %1302 = vmatprep.subr.mxu0 %v68
    %1303 = vmatpush1.msra.mxu0 %v67
    %1304 = vmatprep.subr.mxu0 %v71
    %1305 = vmatpush1.msra.mxu0 %v70
    %1306 = vmatprep.subr.mxu0 %v74
    %1307 = vmatpush1.msra.mxu0 %v73
    %1308 = vmatprep.subr.mxu0 %v77
    %1309 = vmatpush1.msra.mxu0 %v76
    %1310 = vmatprep.subr.mxu0 %v80
    %1311 = vmatpush1.msra.mxu0 %v79
    %1312 = vmatprep.subr.mxu0 %v83
    %1313 = vmatpush1.msra.mxu0 %v82
    %1314 = vmatprep.subr.mxu0 %v86
    %1315 = vmatpush1.msra.mxu0 %v85
    %1316 = vmatprep.subr.mxu0 %v89
    %1317 = vmatpush1.msra.mxu0 %v88
    %1318 = vmatprep.subr.mxu0 0.0
    %1319 = vmatpush1.msra.mxu0 0.0
    %1320 = vmatprep.subr.mxu0 0.0
    %1321 = vmatpush1.msra.mxu0 0.0
    %1322 = vmatprep.subr.mxu0 0.0
    %1323 = vmatpush1.msra.mxu0 0.0
    %1324 = vmatprep.subr.mxu0 0.0
    %1325 = vmatpush1.msra.mxu0 0.0
    %1326 = vmatprep.subr.mxu0 0.0
    %1327 = vmatpush1.msra.mxu0 0.0
    %1328 = vmatprep.subr.mxu0 0.0
    %1329 = vmatpush1.msra.mxu0 0.0
    %1330 = vmatprep.subr.mxu0 0.0
    %1331 = vmatpush1.msra.mxu0 0.0
    %1332 = vmatprep.subr.mxu0 0.0
    %1333 = vmatpush1.msra.mxu0 0.0
    %1334 = vmatprep.subr.mxu0 0.0
    %1335 = vmatpush1.msra.mxu0 0.0
    %1336 = vmatprep.subr.mxu0 0.0
    %1337 = vmatpush1.msra.mxu0 0.0
    %1338 = vmatprep.subr.mxu0 0.0
    %1339 = vmatpush1.msra.mxu0 0.0
    %1340 = vmatprep.subr.mxu0 0.0
    %1341 = vmatpush1.msra.mxu0 0.0
    %1342 = vmatprep.subr.mxu0 0.0
    %1343 = vmatpush1.msra.mxu0 0.0
    %1344 = vmatprep.subr.mxu0 0.0
    %1345 = vmatpush1.msra.mxu0 0.0
    %1346 = vmatprep.subr.mxu0 0.0
    %1347 = vmatpush1.msra.mxu0 0.0
    %1348 = vmatprep.subr.mxu0 0.0
    %1349 = vmatpush1.msra.mxu0 0.0
    %1350 = vmatprep.mubr.f32.mxu0 0.0
    %1351 = vmatmul.mubr.f32.gmra.mrb[0].mxu0 %v1282
    %v1352 = vpop.f32.mrb[0].mxu0
    %v1353 = vadd.f32 %v96, %v1352
    %v1354 = vpop.f32.mrb[0].mxu0
    %v1355 = vadd.f32 %v100, %v1354
    %1356 = vdwg.mxu0
    %1357 = vmatprep.subr.mxu0 0.0
    %1358 = vmatpush1.msra.mxu0 %v45
    %1359 = vmatprep.subr.mxu0 0.0
    %1360 = vmatpush1.msra.mxu0 %v48
    %1361 = vmatprep.subr.mxu0 0.0
    %1362 = vmatpush1.msra.mxu0 %v51
    %1363 = vmatprep.subr.mxu0 0.0
    %1364 = vmatpush1.msra.mxu0 %v54
    %1365 = vmatprep.subr.mxu0 0.0
    %1366 = vmatpush1.msra.mxu0 %v57
    %1367 = vmatprep.subr.mxu0 0.0
    %1368 = vmatpush1.msra.mxu0 %v60
    %1369 = vmatprep.subr.mxu0 0.0
    %1370 = vmatpush1.msra.mxu0 %v63
    %1371 = vmatprep.subr.mxu0 0.0
    %1372 = vmatpush1.msra.mxu0 %v66
    %1373 = vmatprep.subr.mxu0 0.0
    %1374 = vmatpush1.msra.mxu0 %v69
    %1375 = vmatprep.subr.mxu0 0.0
    %1376 = vmatpush1.msra.mxu0 %v72
    %1377 = vmatprep.subr.mxu0 0.0
    %1378 = vmatpush1.msra.mxu0 %v75
    %1379 = vmatprep.subr.mxu0 0.0
    %1380 = vmatpush1.msra.mxu0 %v78
    %1381 = vmatprep.subr.mxu0 0.0
    %1382 = vmatpush1.msra.mxu0 %v81
    %1383 = vmatprep.subr.mxu0 0.0
    %1384 = vmatpush1.msra.mxu0 %v84
    %1385 = vmatprep.subr.mxu0 0.0
    %1386 = vmatpush1.msra.mxu0 %v87
    %1387 = vmatprep.subr.mxu0 0.0
    %1388 = vmatpush1.msra.mxu0 %v90
    %1389 = vmatprep.subr.mxu0 0.0
    %1390 = vmatpush1.msra.mxu0 0.0
    %1391 = vmatprep.subr.mxu0 0.0
    %1392 = vmatpush1.msra.mxu0 0.0
    %1393 = vmatprep.subr.mxu0 0.0
    %1394 = vmatpush1.msra.mxu0 0.0
    %1395 = vmatprep.subr.mxu0 0.0
    %1396 = vmatpush1.msra.mxu0 0.0
    %1397 = vmatprep.subr.mxu0 0.0
    %1398 = vmatpush1.msra.mxu0 0.0
    %1399 = vmatprep.subr.mxu0 0.0
    %1400 = vmatpush1.msra.mxu0 0.0
    %1401 = vmatprep.subr.mxu0 0.0
    %1402 = vmatpush1.msra.mxu0 0.0
    %1403 = vmatprep.subr.mxu0 0.0
    %1404 = vmatpush1.msra.mxu0 0.0
    %1405 = vmatprep.subr.mxu0 0.0
    %1406 = vmatpush1.msra.mxu0 0.0
    %1407 = vmatprep.subr.mxu0 0.0
    %1408 = vmatpush1.msra.mxu0 0.0
    %1409 = vmatprep.subr.mxu0 0.0
    %1410 = vmatpush1.msra.mxu0 0.0
    %1411 = vmatprep.subr.mxu0 0.0
    %1412 = vmatpush1.msra.mxu0 0.0
    %1413 = vmatprep.subr.mxu0 0.0
    %1414 = vmatpush1.msra.mxu0 0.0
    %1415 = vmatprep.subr.mxu0 0.0
    %1416 = vmatpush1.msra.mxu0 0.0
    %1417 = vmatprep.subr.mxu0 0.0
    %1418 = vmatpush1.msra.mxu0 0.0
    %1419 = vmatprep.subr.mxu0 0.0
    %1420 = vmatpush1.msra.mxu0 0.0
    %1421 = vmatprep.mubr.f32.mxu0 0.0
    %1422 = vmatmul.mubr.f32.gmra.mrb[0].mxu0 %v1282
    %v1423 = vpop.f32.mrb[0].mxu0
    %v1424 = vadd.f32 %v104, %v1423
    %v1425 = vpop.f32.mrb[0].mxu0
    %1426 = vdwg.mxu0
    %v1427 = vadd.f32 %v1284, %v1353
    %v1428 = vxor.u32 %v1427, 2147483648
    %v1429 = vmul.f32 %v1428, 1.442695
    %v1430 = vpow.pop %v1429
    %v1431 = vadd.f32 %v1430, 1.0
    %v1432 = vrcp.pop %v1431
    %v1433 = vmul.f32 1.0, %v1432
    %v1435 = vrot.slane %v1284, 4
    %v1437 = vadd.f32 %v1435, %v1355
    %v1438 = vxor.u32 %v1437, 2147483648
    %v1439 = vmul.f32 %v1438, 1.442695
    %v1440 = vpow.pop %v1439
    %v1441 = vadd.f32 %v1440, 1.0
    %v1442 = vrcp.pop %v1441
    %v1443 = vmul.f32 1.0, %v1442
    %v1444 = vmul.f32 %v1433, %v1424
    %v1445 = vadd.f32 %v1285, %v1444
    %v1446 = vtanh.pop %v1445
    %v1447 = vsub.f32 1.0, %v1443
    %v1448 = vmul.f32 %v1447, %v1446
    %v1449 = vmul.f32 %v1443, %v1282
    %v1450 = vadd.f32 %v1448, %v1449
    %1451 = vst [vmem:[#allocation7] sm:$0xf] %v1450
    // Predicated region
    $region22: #{tpu_custom_call.1} parent=1 // pred_check
      _
    $region23: #{tpu_custom_call.1} parent=1 // pred_check_branch
      %1453 = sbr.rel (0) target = $region25
    $region24: #{tpu_custom_call.1} parent=1 // pred_region
      %s1455 = ssub.s32 64, 64
      %1456 = vsyncadd [#allocation4], %s1455
      %s1458 = sshll.u32 [#allocation7], 4
      %s1459 = int_to_ptr.vmem [resolvable:$true] %s1458
      %1461 = dma.vmem_to_hbm [thread:$0]  %s1459, 64, %s3, [#allocation4]
    $region25: #{tpu_custom_call.1} parent=1 // pred_fallthru
      _
    // Predicated region
    $region26: #{tpu_custom_call.1} parent=1 // pred_check
      _
    $region27: #{tpu_custom_call.1} parent=1 // pred_check_branch
      %1463 = sbr.rel (0) target = $region29
    $region28: #{tpu_custom_call.1} parent=1 // pred_region
      %1464 = dma.done [#allocation4], 64
    $region29: #{tpu_custom_call.1} parent=1 // pred_fallthru
      _
    %1465 = vsyncpa [#allocation3], 1
    %1466 = vsyncpa [#allocation6], 1
    %1467 = vsyncpa [#allocation4], 1

</llo_original>
